<compile_context>
chip_gen: v6e
topology: v6e:2x2x1
jax: 0.10.0
libtpu: 0.0.40
codegen_flags: <defaults>
</compile_context>

<pallas_src>
import functools
import math

import jax
import jax.numpy as jnp
from jax.experimental import pallas as pl
from jax.experimental.pallas import tpu as pltpu


# ---------------------------------------------------------------------------
# Hardware-aware knobs
# ---------------------------------------------------------------------------
def _vmem_limit_bytes():
    # ~75% of physical VMEM: ~48 MiB on v7x (64 MiB), ~96 MiB on v5e/v6e (128 MiB).
    cap = 64 * 1024 * 1024
    try:
        cap = int(pltpu.get_tpu_info().vmem_capacity_bytes)
    except Exception:
        pass
    return int(min(cap * 3 // 4, 110 * 1024 * 1024))


def _use_bf16_exp():
    # bf16 EUP exp path exists on v6e/v7x; v5e and older have no bf16 EUP/VPU.
    try:
        kind = jax.devices()[0].device_kind.lower()
    except Exception:
        return True
    return not any(t in kind for t in ("v2", "v3", "v4", "v5"))


_VMEM_LIMIT = _vmem_limit_bytes()
_EXP_DTYPE = jnp.bfloat16 if _use_bf16_exp() else jnp.float32


# ---------------------------------------------------------------------------
# Tile-size helpers
# ---------------------------------------------------------------------------
def _pick_tile(dim, target, aligns=(128, 8)):
    """Largest divisor of `dim` <= target that is a multiple of one of `aligns`
    (tried in order); the full dim when dim <= target."""
    if dim <= target:
        return dim
    for align in aligns:
        t = (target // align) * align
        while t >= align:
            if dim % t == 0:
                return t
            t -= align
    # TODO(synk): pad + mask irregular dims instead of the full-dim fallback.
    return dim


def _largest_divisor(n, cap, pred=lambda d: True):
    best = None
    for d in range(1, n + 1):
        if n % d == 0 and d <= cap and pred(d):
            best = d
    return best


# ---------------------------------------------------------------------------
# Projection -> head-major kernel
#   x:(B,S,E) @ w:(E, T*E) + b  ->  out:(T, B*H, S, D)   (T targets, e.g. q/k/v)
# The head repack is fused into the epilogue (transposing out_spec), so no
# plain-JAX (B,S,H,D)->(B,H,S,D) transposes are needed afterwards.
# ---------------------------------------------------------------------------
def _make_proj_kernel(To, Go, D, single_k):
    def epilogue(acc, b_ref, o_ref):
        res = (acc + b_ref[...].astype(jnp.float32)).astype(o_ref.dtype)  # (tm, W)
        for t in range(To):
            for g in range(Go):
                c0 = (t * Go + g) * D
                o_ref[t, g] = res[:, c0:c0 + D]

    if single_k:
        def kernel(x_ref, w_ref, b_ref, o_ref):
            acc = jnp.dot(x_ref[0], w_ref[...], preferred_element_type=jnp.float32)
            epilogue(acc, b_ref, o_ref)
    else:
        def kernel(x_ref, w_ref, b_ref, o_ref, acc_ref):
            k = pl.program_id(3)

            @pl.when(k == 0)
            def _():
                acc_ref[...] = jnp.zeros_like(acc_ref)

            acc_ref[...] += jnp.dot(x_ref[0], w_ref[...],
                                    preferred_element_type=jnp.float32)

            @pl.when(k == pl.num_programs(3) - 1)
            def _():
                epilogue(acc_ref[...], b_ref, o_ref)

    return kernel


def pallas_proj_heads(x, w, b, num_heads, *, tm_target=256, tk_target=2048,
                      ncol_cap=512):
    """x: (B, S, E); w: (E, T*E) with columns ordered [target, head, d];
    b: (1, T*E). Returns (T, B*num_heads, S, D) head-major projections."""
    B, S, E = x.shape
    K, TE = w.shape
    assert K == E and TE % E == 0
    T = TE // E
    H = num_heads
    D = E // H
    dtype = x.dtype

    tm = _pick_tile(S, tm_target, aligns=(16, 8))
    tk = _pick_tile(E, tk_target, aligns=(128, 8))
    nk = E // tk
    single_k = (nk == 1)  # weight VMEM-resident -> no accumulator round trip

    # Column-group width W: head-aligned and lane-dense (multiple of 128) when
    # possible; otherwise (tiny E) one group covering all T*E columns.
    gH = _largest_divisor(H, max(1, ncol_cap // D),
                          pred=lambda d: (d * D) % 128 == 0)
    if gH is not None:
        W = gH * D
        HB = H // gH
        NG = T * HB
        To, Go = 1, gH
        out_block = (1, gH, tm, D)
        out_map = lambda bi, si, j, k: (j // HB, bi * HB + (j % HB), si, 0)
    else:
        W = T * E
        NG = 1
        To, Go = T, H
        out_block = (T, H, tm, D)
        out_map = lambda bi, si, j, k: (0, bi, si, 0)

    grid = (B, S // tm, NG, nk)
    kernel = _make_proj_kernel(To, Go, D, single_k)
    scratch = [] if single_k else [pltpu.VMEM((tm, W), jnp.float32)]

    return pl.pallas_call(
        kernel,
        out_shape=jax.ShapeDtypeStruct((T, B * H, S, D), dtype),
        grid_spec=pltpu.PrefetchScalarGridSpec(
            num_scalar_prefetch=0,
            grid=grid,
            in_specs=[
                pl.BlockSpec((1, tm, tk), lambda bi, si, j, k: (bi, si, k)),
                pl.BlockSpec((tk, W), lambda bi, si, j, k: (k, j)),
                pl.BlockSpec((1, W), lambda bi, si, j, k: (0, j)),
            ],
            out_specs=pl.BlockSpec(out_block, out_map),
            scratch_shapes=scratch,
        ),
        compiler_params=pltpu.CompilerParams(
            dimension_semantics=("parallel", "parallel", "parallel", "arbitrary"),
            vmem_limit_bytes=_VMEM_LIMIT,
        ),
    )(x, w, b)


# ---------------------------------------------------------------------------
# Flash attention kernel (non-causal, no mask, eval/no-dropout)
# q4:(Tq,BH,Sq,D), k4/v4:(Tk,BH,Skv,D) head-major; softmax scale pre-folded
# into the q projection weights. Static indices select which target to read.
# ---------------------------------------------------------------------------
def _make_flash_attn_kernel(exp_dtype):
    def kernel(q_ref, k_ref, v_ref, o_ref, m_sc, l_sc, acc_sc):
        kv = pl.program_id(2)

        @pl.when(kv == 0)
        def _():
            m_sc[...] = jnp.full_like(m_sc, -jnp.inf)
            l_sc[...] = jnp.zeros_like(l_sc)
            acc_sc[...] = jnp.zeros_like(acc_sc)

        q = q_ref[0]                                   # (gb, tq, D) bf16
        k = k_ref[0]                                   # (gb, tk, D) bf16
        v = v_ref[0]                                   # (gb, tk, D) bf16
        s = jnp.einsum('bqd,bkd->bqk', q, k,
                       preferred_element_type=jnp.float32)
        m_prev = m_sc[...]
        m_new = jnp.maximum(m_prev, s.max(axis=-1, keepdims=True))
        alpha = jnp.exp(m_prev - m_new)
        # exp in bf16 on v6e/v7x (bf16 EUP, halves p traffic); f32 on v5e.
        p = jnp.exp((s - m_new).astype(exp_dtype))
        l_sc[...] = alpha * l_sc[...] + jnp.sum(
            p.astype(jnp.float32), axis=-1, keepdims=True)
        acc_sc[...] = alpha * acc_sc[...] + jnp.einsum(
            'bqk,bkd->bqd', p.astype(v.dtype), v,
            preferred_element_type=jnp.float32)
        m_sc[...] = m_new

        @pl.when(kv == pl.num_programs(2) - 1)
        def _():
            inv_l = pl.reciprocal(l_sc[...], approx=True)     # EUP slot, ~free
            o_ref[...] = (acc_sc[...] * inv_l).astype(o_ref.dtype)

    return kernel


def pallas_flash_attention(q4, q_idx, k4, k_idx, v4, v_idx, *,
                           tq_target=256, tk_target=256,
                           score_budget_bytes=2 * 1024 * 1024):
    """Non-causal, unmasked, eval-mode flash attention. Returns (B*H, Sq, D)."""
    _, BH, Sq, D = q4.shape
    _, _, Skv, _ = k4.shape
    tq = _pick_tile(Sq, tq_target, aligns=(128, 8))
    tk = _pick_tile(Skv, tk_target, aligns=(128, 8))
    # Group (batch*head) rows per block: ~2 MiB of f32 scores per step amortizes
    # the ~0.35us/step grid overhead while fitting the v7x VMEM budget.
    gb_cap = max(1, score_budget_bytes // (tq * tk * 4))
    if BH >= 2:
        gb_cap = min(gb_cap, BH // 2)   # keep >= 2 blocks for v7x megacore
    gb = _largest_divisor(BH, gb_cap)
    grid = (BH // gb, Sq // tq, Skv // tk)

    return pl.pallas_call(
        _make_flash_attn_kernel(_EXP_DTYPE),
        out_shape=jax.ShapeDtypeStruct((BH, Sq, D), q4.dtype),
        grid_spec=pltpu.PrefetchScalarGridSpec(
            num_scalar_prefetch=0,
            grid=grid,
            in_specs=[
                pl.BlockSpec((1, gb, tq, D),
                             lambda b, qi, ki, t=q_idx: (t, b, qi, 0)),
                pl.BlockSpec((1, gb, tk, D),
                             lambda b, qi, ki, t=k_idx: (t, b, ki, 0)),
                pl.BlockSpec((1, gb, tk, D),
                             lambda b, qi, ki, t=v_idx: (t, b, ki, 0)),
            ],
            out_specs=pl.BlockSpec((gb, tq, D), lambda b, qi, ki: (b, qi, 0)),
            scratch_shapes=[
                pltpu.VMEM((gb, tq, 1), jnp.float32),   # running max
                pltpu.VMEM((gb, tq, 1), jnp.float32),   # running sum
                pltpu.VMEM((gb, tq, D), jnp.float32),   # output accumulator
            ],
        ),
        compiler_params=pltpu.CompilerParams(
            dimension_semantics=("parallel", "parallel", "arbitrary"),
            vmem_limit_bytes=_VMEM_LIMIT,
        ),
    )(q4, k4, v4)


# ---------------------------------------------------------------------------
# Output projection, reading head-major context directly:
#   out[b, s, :] = sum_h ctx[b*H + h, s, :] @ w_o[h] + b_o
# (fuses the inverse head transpose into the input BlockSpec / per-head dots)
# ---------------------------------------------------------------------------
def _make_out_proj_kernel(gHk, single_k):
    def head_dots(ctx_ref, w_ref):
        acc = jnp.dot(ctx_ref[0], w_ref[0], preferred_element_type=jnp.float32)
        for h in range(1, gHk):
            acc = acc + jnp.dot(ctx_ref[h], w_ref[h],
                                preferred_element_type=jnp.float32)
        return acc

    if single_k:
        def kernel(ctx_ref, w_ref, b_ref, o_ref):
            acc = head_dots(ctx_ref, w_ref)
            o_ref[0] = (acc + b_ref[...].astype(jnp.float32)).astype(o_ref.dtype)
    else:
        def kernel(ctx_ref, w_ref, b_ref, o_ref, acc_ref):
            k = pl.program_id(3)

            @pl.when(k == 0)
            def _():
                acc_ref[...] = jnp.zeros_like(acc_ref)

            acc_ref[...] += head_dots(ctx_ref, w_ref)

            @pl.when(k == pl.num_programs(3) - 1)
            def _():
                o_ref[0] = (acc_ref[...] + b_ref[...].astype(jnp.float32)
                            ).astype(o_ref.dtype)

    return kernel


def pallas_out_proj(ctx, w_heads, b, batch, *, tm_target=256, tn_target=512,
                    k_cap=2048):
    """ctx: (B*H, S, D) head-major; w_heads: (H, D, E); b: (1, E) -> (B, S, E)."""
    H, D, E = w_heads.shape
    BH, S, _ = ctx.shape
    B = batch
    dtype = ctx.dtype

    tm = _pick_tile(S, tm_target, aligns=(16, 8))
    tn = _pick_tile(E, tn_target, aligns=(128, 8))
    gHk = _largest_divisor(H, max(1, k_cap // D))
    nk = H // gHk
    single_k = (nk == 1)
    HBk = H // gHk

    grid = (B, S // tm, E // tn, nk)
    kernel = _make_out_proj_kernel(gHk, single_k)
    scratch = [] if single_k else [pltpu.VMEM((tm, tn), jnp.float32)]

    return pl.pallas_call(
        kernel,
        out_shape=jax.ShapeDtypeStruct((B, S, E), dtype),
        grid_spec=pltpu.PrefetchScalarGridSpec(
            num_scalar_prefetch=0,
            grid=grid,
            in_specs=[
                pl.BlockSpec((gHk, tm, D),
                             lambda bi, si, j, k: (bi * HBk + k, si, 0)),
                pl.BlockSpec((gHk, D, tn), lambda bi, si, j, k: (k, 0, j)),
                pl.BlockSpec((1, tn), lambda bi, si, j, k: (0, j)),
            ],
            out_specs=pl.BlockSpec((1, tm, tn), lambda bi, si, j, k: (bi, si, j)),
            scratch_shapes=scratch,
        ),
        compiler_params=pltpu.CompilerParams(
            dimension_semantics=("parallel", "parallel", "parallel", "arbitrary"),
            vmem_limit_bytes=_VMEM_LIMIT,
        ),
    )(ctx, w_heads, b)


# ---------------------------------------------------------------------------
# One-time parameter preprocessing (hoisted out of the per-call path)
# ---------------------------------------------------------------------------
def prepare_params(params, num_heads):
    """Fold 1/sqrt(head_dim) into Wq, pre-transpose to (in, out), pre-concatenate
    the fused QKV / KV weights, and reshape Wo per head. Run once at load time."""
    E = params["Wq_w"].shape[0]
    H = num_heads
    assert E % H == 0
    D = E // H
    assert D % 8 == 0 and D <= 128
    scale = 1.0 / math.sqrt(D)
    dtype = params["Wq_w"].dtype

    f32 = lambda a: a.astype(jnp.float32)
    cast = lambda a: a.astype(dtype)

    wq_t = f32(params["Wq_w"]).T * scale          # (E, E), scale folded (exact rewrite)
    bq = f32(params["Wq_b"]) * scale
    wk_t = f32(params["Wk_w"]).T
    bk = f32(params["Wk_b"])
    wv_t = f32(params["Wv_w"]).T
    bv = f32(params["Wv_b"])
    wo_t = f32(params["Wo_w"]).T                  # (E_in, E_out)

    return {
        "w_qkv": cast(jnp.concatenate([wq_t, wk_t, wv_t], axis=1)),      # (E, 3E)
        "b_qkv": cast(jnp.concatenate([bq, bk, bv]).reshape(1, 3 * E)),
        "w_q": cast(wq_t), "b_q": cast(bq.reshape(1, E)),
        "w_kv": cast(jnp.concatenate([wk_t, wv_t], axis=1)),             # (E, 2E)
        "b_kv": cast(jnp.concatenate([bk, bv]).reshape(1, 2 * E)),
        "w_k": cast(wk_t), "b_k": cast(bk.reshape(1, E)),
        "w_v": cast(wv_t), "b_v": cast(bv.reshape(1, E)),
        "w_o": cast(wo_t.reshape(H, D, E)),                              # (H, D, E)
        "b_o": cast(f32(params["Wo_b"]).reshape(1, E)),
    }


# ---------------------------------------------------------------------------
# FlashMHA forward
# ---------------------------------------------------------------------------
@functools.partial(jax.jit, static_argnames=("num_heads", "mode"))
def _flash_mha_impl(prep, query, key, value, num_heads, mode):
    B, Sq, E = query.shape
    H = num_heads

    if mode == "self":
        # Single fused (B,S,E) x (E,3E) projection, head-major output.
        qkv = pallas_proj_heads(query, prep["w_qkv"], prep["b_qkv"], H)  # (3,BH,S,D)
        q4, k4, v4 = qkv, qkv, qkv
        qi, ki, vi = 0, 1, 2
    elif mode == "kv_shared":
        q4 = pallas_proj_heads(query, prep["w_q"], prep["b_q"], H)       # (1,BH,Sq,D)
        kv4 = pallas_proj_heads(key, prep["w_kv"], prep["b_kv"], H)      # (2,BH,Skv,D)
        k4, v4 = kv4, kv4
        qi, ki, vi = 0, 0, 1
    else:
        q4 = pallas_proj_heads(query, prep["w_q"], prep["b_q"], H)
        k4 = pallas_proj_heads(key, prep["w_k"], prep["b_k"], H)
        v4 = pallas_proj_heads(value, prep["w_v"], prep["b_v"], H)
        qi, ki, vi = 0, 0, 0

    # TODO(synk): key_padding_mask / causal / dropout paths not implemented
    # (module defaults: causal=False, mask=None, dropout inactive in eval).
    ctx = pallas_flash_attention(q4, qi, k4, ki, v4, vi)                 # (B*H, Sq, D)
    return pallas_out_proj(ctx, prep["w_o"], prep["b_o"], B)             # (B, Sq, E)


def flash_mha_forward(prep, query, key, value, num_heads):
    """query/key/value: (B, S, E) bf16. Returns (B, S, E) bf16."""
    if query is key and key is value:
        mode = "self"
    elif key is value:
        mode = "kv_shared"
    else:
        mode = "cross"
    return _flash_mha_impl(prep, query, key, value, num_heads=num_heads, mode=mode)


# ---------------------------------------------------------------------------
# Deterministic parameter init (mirrors nn.Linear(E, E, bias=True), torch layout)
# ---------------------------------------------------------------------------
def init_params(key, embed_dim, dtype=jnp.bfloat16):
    E = embed_dim
    keys = jax.random.split(key, 8)
    bound = 1.0 / math.sqrt(E)

    def lin(kw, kb):
        w = jax.random.uniform(kw, (E, E), jnp.float32, -bound, bound).astype(dtype)
        b = jax.random.uniform(kb, (E,), jnp.float32, -bound, bound).astype(dtype)
        return w, b

    Wq_w, Wq_b = lin(keys[0], keys[1])
    Wk_w, Wk_b = lin(keys[2], keys[3])
    Wv_w, Wv_b = lin(keys[4], keys[5])
    Wo_w, Wo_b = lin(keys[6], keys[7])
    return dict(Wq_w=Wq_w, Wq_b=Wq_b, Wk_w=Wk_w, Wk_b=Wk_b,
                Wv_w=Wv_w, Wv_b=Wv_b, Wo_w=Wo_w, Wo_b=Wo_b)


# ---------------------------------------------------------------------------
# Pure-JAX reference (f32) for a correctness check
# ---------------------------------------------------------------------------
def _reference_mha(params, query, key, value, num_heads):
    E = query.shape[-1]
    H = num_heads
    D = E // H

    def lin(x, w, b):
        return x.astype(jnp.float32) @ w.astype(jnp.float32).T + b.astype(jnp.float32)

    q = lin(query, params["Wq_w"], params["Wq_b"])
    k = lin(key, params["Wk_w"], params["Wk_b"])
    v = lin(value, params["Wv_w"], params["Wv_b"])
    B, Sq, _ = q.shape
    Skv = k.shape[1]
    q = q.reshape(B, Sq, H, D).transpose(0, 2, 1, 3)
    k = k.reshape(B, Skv, H, D).transpose(0, 2, 1, 3)
    v = v.reshape(B, Skv, H, D).transpose(0, 2, 1, 3)
    s = jnp.einsum('bhqd,bhkd->bhqk', q, k) / math.sqrt(D)
    p = jax.nn.softmax(s, axis=-1)
    ctx = jnp.einsum('bhqk,bhkd->bhqd', p, v)
    ctx = ctx.transpose(0, 2, 1, 3).reshape(B, Sq, E)
    return lin(ctx, params["Wo_w"], params["Wo_b"])


if __name__ == "__main__":
    B, S, E, H = 2, 8, 32, 4  # head_dim = 8 (divisible by 8, <= 128)
    root = jax.random.PRNGKey(0)
    k_params, k_x = jax.random.split(root, 2)

    params = init_params(k_params, E)
    prep = prepare_params(params, H)  # one-time weight preprocessing (hoisted)
    x = jax.random.normal(k_x, (B, S, E), jnp.float32).astype(jnp.bfloat16)

    # Typical FlashMHA usage: self-attention (query = key = value) -> fused QKV path.
    out = flash_mha_forward(prep, x, x, x, num_heads=H)
    out = jax.block_until_ready(out)

    assert out.shape == (B, S, E) and out.dtype == jnp.bfloat16
    assert bool(jnp.all(jnp.isfinite(out.astype(jnp.float32))))

    ref = _reference_mha(params, x, x, x, H)
    err = float(jnp.max(jnp.abs(out.astype(jnp.float32) - ref)))
    assert err < 0.08, f"max abs error vs reference: {err}"
    print("KERNEL_OK")
</pallas_src>

<mosaic_0001>
module attributes {stable_mosaic.version = 11 : i64} {
  func.func @kernel(%arg0: i32, %arg1: i32, %arg2: i32, %arg3: memref<1x4x8x8xbf16, #tpu.memory_space<vmem>>, %arg4: memref<1x4x8x8xbf16, #tpu.memory_space<vmem>>, %arg5: memref<1x4x8x8xbf16, #tpu.memory_space<vmem>>, %arg6: memref<4x8x8xbf16, #tpu.memory_space<vmem>>, %arg7: memref<4x8x1xf32, #tpu.memory_space<vmem>>, %arg8: memref<4x8x1xf32, #tpu.memory_space<vmem>>, %arg9: memref<4x8x8xf32, #tpu.memory_space<vmem>>) attributes {dimension_semantics = [#tpu.dimension_semantics<parallel>, #tpu.dimension_semantics<parallel>, #tpu.dimension_semantics<arbitrary>], iteration_bounds = array<i64: 2, 1, 1>, scalar_prefetch = 0 : i64, scratch_operands = 3 : i64, tpu.core_type = #tpu.core_type<tc>, window_params = [{transform_indices = @transform_0, window_bounds = array<i64: 1, 4, 8, 8>}, {transform_indices = @transform_1, window_bounds = array<i64: 1, 4, 8, 8>}, {transform_indices = @transform_2, window_bounds = array<i64: 1, 4, 8, 8>}, {transform_indices = @transform_3, window_bounds = array<i64: 4, 8, 8>}]} {
    %c0_i32 = arith.constant 0 : i32
    %0 = arith.cmpi eq, %arg2, %c0_i32 : i32
    %1 = arith.extui %0 : i1 to i32
    %c0_i32_0 = arith.constant 0 : i32
    %2 = arith.cmpi ne, %1, %c0_i32_0 : i32
    scf.if %2 {
      %cst_35 = arith.constant 0xFF800000 : f32
      %37 = vector.broadcast %cst_35 : f32 to vector<4x8x1xf32>
      %c0_36 = arith.constant 0 : index
      %c0_37 = arith.constant 0 : index
      %c0_38 = arith.constant 0 : index
      %38 = vector.load %arg7[%c0_36, %c0_37, %c0_38] : memref<4x8x1xf32, #tpu.memory_space<vmem>>, vector<4x8x1xf32>
      tpu.vector_store %arg7[%c0_36, %c0_37, %c0_38], %37 {strides = array<i32>} : memref<4x8x1xf32, #tpu.memory_space<vmem>>, vector<4x8x1xf32>,
      %cst_39 = arith.constant 0.000000e+00 : f32
      %39 = vector.broadcast %cst_39 : f32 to vector<4x8x1xf32>
      %c0_40 = arith.constant 0 : index
      %c0_41 = arith.constant 0 : index
      %c0_42 = arith.constant 0 : index
      %40 = vector.load %arg8[%c0_40, %c0_41, %c0_42] : memref<4x8x1xf32, #tpu.memory_space<vmem>>, vector<4x8x1xf32>
      tpu.vector_store %arg8[%c0_40, %c0_41, %c0_42], %39 {strides = array<i32>} : memref<4x8x1xf32, #tpu.memory_space<vmem>>, vector<4x8x1xf32>,
      %cst_43 = arith.constant 0.000000e+00 : f32
      %41 = vector.broadcast %cst_43 : f32 to vector<4x8x8xf32>
      %c0_44 = arith.constant 0 : index
      %c0_45 = arith.constant 0 : index
      %c0_46 = arith.constant 0 : index
      %42 = vector.load %arg9[%c0_44, %c0_45, %c0_46] : memref<4x8x8xf32, #tpu.memory_space<vmem>>, vector<4x8x8xf32>
      tpu.vector_store %arg9[%c0_44, %c0_45, %c0_46], %41 {strides = array<i32>} : memref<4x8x8xf32, #tpu.memory_space<vmem>>, vector<4x8x8xf32>,
    } else {
    }
    %c0 = arith.constant 0 : index
    %c0_1 = arith.constant 0 : index
    %c0_2 = arith.constant 0 : index
    %c0_3 = arith.constant 0 : index
    %3 = vector.load %arg3[%c0, %c0_1, %c0_2, %c0_3] : memref<1x4x8x8xbf16, #tpu.memory_space<vmem>>, vector<1x4x8x8xbf16>
    %4 = vector.shape_cast %3 : vector<1x4x8x8xbf16> to vector<4x8x8xbf16>
    %c0_4 = arith.constant 0 : index
    %c0_5 = arith.constant 0 : index
    %c0_6 = arith.constant 0 : index
    %c0_7 = arith.constant 0 : index
    %5 = vector.load %arg4[%c0_4, %c0_5, %c0_6, %c0_7] : memref<1x4x8x8xbf16, #tpu.memory_space<vmem>>, vector<1x4x8x8xbf16>
    %6 = vector.shape_cast %5 : vector<1x4x8x8xbf16> to vector<4x8x8xbf16>
    %c0_8 = arith.constant 0 : index
    %c0_9 = arith.constant 0 : index
    %c0_10 = arith.constant 0 : index
    %c0_11 = arith.constant 0 : index
    %7 = vector.load %arg5[%c0_8, %c0_9, %c0_10, %c0_11] : memref<1x4x8x8xbf16, #tpu.memory_space<vmem>>, vector<1x4x8x8xbf16>
    %8 = vector.shape_cast %7 : vector<1x4x8x8xbf16> to vector<4x8x8xbf16>
    "tpu.trace_start"() <{level = 10 : i32, message = "bqd,bkd->bqk"}> : () -> ()
    %cst = arith.constant dense<0.000000e+00> : vector<4x8x8xf32>
    %9 = tpu.matmul %4, %6, %cst {dimension_numbers = #tpu.dot_dimension_numbers<[2], [2], [1], [1], [0, 0, 0, 1, 1, 1], [0], [0]>} : vector<4x8x8xbf16>, vector<4x8x8xbf16>, vector<4x8x8xf32> -> vector<4x8x8xf32>
    "tpu.trace_stop"() : () -> ()
    %c0_12 = arith.constant 0 : index
    %c0_13 = arith.constant 0 : index
    %c0_14 = arith.constant 0 : index
    %10 = vector.load %arg7[%c0_12, %c0_13, %c0_14] : memref<4x8x1xf32, #tpu.memory_space<vmem>>, vector<4x8x1xf32>
    %cst_15 = arith.constant dense<0xFF800000> : vector<4x8xf32>
    %11 = vector.multi_reduction <maximumf>, %9, %cst_15 [2] : vector<4x8x8xf32> to vector<4x8xf32>
    %12 = vector.shape_cast %11 : vector<4x8xf32> to vector<4x8x1xf32>
    %13 = arith.maximumf %10, %12 : vector<4x8x1xf32>
    %14 = arith.subf %10, %13 : vector<4x8x1xf32>
    %15 = math.exp %14 : vector<4x8x1xf32>
    %16 = vector.broadcast %13 : vector<4x8x1xf32> to vector<4x8x8xf32>
    %17 = arith.subf %9, %16 : vector<4x8x8xf32>
    %18 = arith.truncf %17 : vector<4x8x8xf32> to vector<4x8x8xbf16>
    %19 = math.exp %18 : vector<4x8x8xbf16>
    %c0_16 = arith.constant 0 : index
    %c0_17 = arith.constant 0 : index
    %c0_18 = arith.constant 0 : index
    %20 = vector.load %arg8[%c0_16, %c0_17, %c0_18] : memref<4x8x1xf32, #tpu.memory_space<vmem>>, vector<4x8x1xf32>
    %21 = arith.mulf %15, %20 : vector<4x8x1xf32>
    %22 = arith.extf %19 : vector<4x8x8xbf16> to vector<4x8x8xf32>
    %cst_19 = arith.constant dense<0.000000e+00> : vector<4x8xf32>
    %23 = vector.multi_reduction <add>, %22, %cst_19 [2] : vector<4x8x8xf32> to vector<4x8xf32>
    %24 = vector.shape_cast %23 : vector<4x8xf32> to vector<4x8x1xf32>
    %25 = arith.addf %21, %24 : vector<4x8x1xf32>
    %c0_20 = arith.constant 0 : index
    %c0_21 = arith.constant 0 : index
    %c0_22 = arith.constant 0 : index
    %26 = vector.load %arg8[%c0_20, %c0_21, %c0_22] : memref<4x8x1xf32, #tpu.memory_space<vmem>>, vector<4x8x1xf32>
    tpu.vector_store %arg8[%c0_20, %c0_21, %c0_22], %25 {strides = array<i32>} : memref<4x8x1xf32, #tpu.memory_space<vmem>>, vector<4x8x1xf32>,
    %c0_23 = arith.constant 0 : index
    %c0_24 = arith.constant 0 : index
    %c0_25 = arith.constant 0 : index
    %27 = vector.load %arg9[%c0_23, %c0_24, %c0_25] : memref<4x8x8xf32, #tpu.memory_space<vmem>>, vector<4x8x8xf32>
    %28 = vector.broadcast %15 : vector<4x8x1xf32> to vector<4x8x8xf32>
    %29 = arith.mulf %28, %27 : vector<4x8x8xf32>
    "tpu.trace_start"() <{level = 10 : i32, message = "bqk,bkd->bqd"}> : () -> ()
    %cst_26 = arith.constant dense<0.000000e+00> : vector<4x8x8xf32>
    %30 = tpu.matmul %19, %8, %cst_26 {dimension_numbers = #tpu.dot_dimension_numbers<[2], [1], [1], [2], [0, 0, 0, 1, 1, 2], [0], [0]>} : vector<4x8x8xbf16>, vector<4x8x8xbf16>, vector<4x8x8xf32> -> vector<4x8x8xf32>
    "tpu.trace_stop"() : () -> ()
    %31 = arith.addf %29, %30 : vector<4x8x8xf32>
    %c0_27 = arith.constant 0 : index
    %c0_28 = arith.constant 0 : index
    %c0_29 = arith.constant 0 : index
    %32 = vector.load %arg9[%c0_27, %c0_28, %c0_29] : memref<4x8x8xf32, #tpu.memory_space<vmem>>, vector<4x8x8xf32>
    tpu.vector_store %arg9[%c0_27, %c0_28, %c0_29], %31 {strides = array<i32>} : memref<4x8x8xf32, #tpu.memory_space<vmem>>, vector<4x8x8xf32>,
    %c0_30 = arith.constant 0 : index
    %c0_31 = arith.constant 0 : index
    %c0_32 = arith.constant 0 : index
    %33 = vector.load %arg7[%c0_30, %c0_31, %c0_32] : memref<4x8x1xf32, #tpu.memory_space<vmem>>, vector<4x8x1xf32>
    tpu.vector_store %arg7[%c0_30, %c0_31, %c0_32], %13 {strides = array<i32>} : memref<4x8x1xf32, #tpu.memory_space<vmem>>, vector<4x8x1xf32>,
    %c0_i32_33 = arith.constant 0 : i32
    %34 = arith.cmpi eq, %arg2, %c0_i32_33 : i32
    %35 = arith.extui %34 : i1 to i32
    %c0_i32_34 = arith.constant 0 : i32
    %36 = arith.cmpi ne, %35, %c0_i32_34 : i32
    scf.if %36 {
      %c0_35 = arith.constant 0 : index
      %c0_36 = arith.constant 0 : index
      %c0_37 = arith.constant 0 : index
      %37 = vector.load %arg8[%c0_35, %c0_36, %c0_37] : memref<4x8x1xf32, #tpu.memory_space<vmem>>, vector<4x8x1xf32>
      %38 = tpu.reciprocal %37 {approx = true} : vector<4x8x1xf32> -> vector<4x8x1xf32>
      %c0_38 = arith.constant 0 : index
      %c0_39 = arith.constant 0 : index
      %c0_40 = arith.constant 0 : index
      %39 = vector.load %arg9[%c0_38, %c0_39, %c0_40] : memref<4x8x8xf32, #tpu.memory_space<vmem>>, vector<4x8x8xf32>
      %40 = vector.broadcast %38 : vector<4x8x1xf32> to vector<4x8x8xf32>
      %41 = arith.mulf %39, %40 : vector<4x8x8xf32>
      %42 = arith.truncf %41 : vector<4x8x8xf32> to vector<4x8x8xbf16>
      %c0_41 = arith.constant 0 : index
      %c0_42 = arith.constant 0 : index
      %c0_43 = arith.constant 0 : index
      %43 = vector.load %arg6[%c0_41, %c0_42, %c0_43] : memref<4x8x8xbf16, #tpu.memory_space<vmem>>, vector<4x8x8xbf16>
      tpu.vector_store %arg6[%c0_41, %c0_42, %c0_43], %42 {strides = array<i32>} : memref<4x8x8xbf16, #tpu.memory_space<vmem>>, vector<4x8x8xbf16>,
    } else {
    }
    return
  }
  func.func @transform_0(%arg0: i32, %arg1: i32, %arg2: i32) -> (i32, i32, i32, i32) {
    %c0_i32 = arith.constant 0 : i32
    %c0_i32_0 = arith.constant 0 : i32
    %c0_i32_1 = arith.constant 0 : i32
    return %c0_i32, %arg0, %arg1, %c0_i32_0 : i32, i32, i32, i32
  }
  func.func @transform_1(%arg0: i32, %arg1: i32, %arg2: i32) -> (i32, i32, i32, i32) {
    %c1_i32 = arith.constant 1 : i32
    %c0_i32 = arith.constant 0 : i32
    %c0_i32_0 = arith.constant 0 : i32
    return %c1_i32, %arg0, %arg2, %c0_i32 : i32, i32, i32, i32
  }
  func.func @transform_2(%arg0: i32, %arg1: i32, %arg2: i32) -> (i32, i32, i32, i32) {
    %c2_i32 = arith.constant 2 : i32
    %c0_i32 = arith.constant 0 : i32
    %c0_i32_0 = arith.constant 0 : i32
    return %c2_i32, %arg0, %arg2, %c0_i32 : i32, i32, i32, i32
  }
  func.func @transform_3(%arg0: i32, %arg1: i32, %arg2: i32) -> (i32, i32, i32) {
    %c0_i32 = arith.constant 0 : i32
    %c0_i32_0 = arith.constant 0 : i32
    return %arg0, %arg1, %c0_i32 : i32, i32, i32
  }
}

module attributes {stable_mosaic.version = 11 : i64} {
  func.func @kernel(%arg0: i32, %arg1: i32, %arg2: i32, %arg3: i32, %arg4: memref<4x8x8xbf16, #tpu.memory_space<vmem>>, %arg5: memref<4x8x32xbf16, #tpu.memory_space<vmem>>, %arg6: memref<1x32xbf16, #tpu.memory_space<vmem>>, %arg7: memref<1x8x32xbf16, #tpu.memory_space<vmem>>) attributes {dimension_semantics = [#tpu.dimension_semantics<parallel>, #tpu.dimension_semantics<parallel>, #tpu.dimension_semantics<parallel>, #tpu.dimension_semantics<arbitrary>], iteration_bounds = array<i64: 2, 1, 1, 1>, scalar_prefetch = 0 : i64, scratch_operands = 0 : i64, tpu.core_type = #tpu.core_type<tc>, window_params = [{transform_indices = @transform_0, window_bounds = array<i64: 4, 8, 8>}, {transform_indices = @transform_1, window_bounds = array<i64: 4, 8, 32>}, {transform_indices = @transform_2, window_bounds = array<i64: 1, 32>}, {transform_indices = @transform_3, window_bounds = array<i64: 1, 8, 32>}]} {
    %c0 = arith.constant 0 : index
    %c0_0 = arith.constant 0 : index
    %c0_1 = arith.constant 0 : index
    %0 = vector.load %arg4[%c0, %c0_0, %c0_1] : memref<4x8x8xbf16, #tpu.memory_space<vmem>>, vector<1x8x8xbf16>
    %1 = vector.shape_cast %0 : vector<1x8x8xbf16> to vector<8x8xbf16>
    %c0_2 = arith.constant 0 : index
    %c0_3 = arith.constant 0 : index
    %c0_4 = arith.constant 0 : index
    %2 = vector.load %arg5[%c0_2, %c0_3, %c0_4] : memref<4x8x32xbf16, #tpu.memory_space<vmem>>, vector<1x8x32xbf16>
    %3 = vector.shape_cast %2 : vector<1x8x32xbf16> to vector<8x32xbf16>
    %cst = arith.constant dense<0.000000e+00> : vector<8x32xf32>
    %4 = tpu.matmul %1, %3, %cst {dimension_numbers = #tpu.dot_dimension_numbers<[1], [0], [0], [1], [0, 0, 1, 1], [], []>} : vector<8x8xbf16>, vector<8x32xbf16>, vector<8x32xf32> -> vector<8x32xf32>
    %c1 = arith.constant 1 : index
    %c0_5 = arith.constant 0 : index
    %c0_6 = arith.constant 0 : index
    %5 = vector.load %arg4[%c1, %c0_5, %c0_6] : memref<4x8x8xbf16, #tpu.memory_space<vmem>>, vector<1x8x8xbf16>
    %6 = vector.shape_cast %5 : vector<1x8x8xbf16> to vector<8x8xbf16>
    %c1_7 = arith.constant 1 : index
    %c0_8 = arith.constant 0 : index
    %c0_9 = arith.constant 0 : index
    %7 = vector.load %arg5[%c1_7, %c0_8, %c0_9] : memref<4x8x32xbf16, #tpu.memory_space<vmem>>, vector<1x8x32xbf16>
    %8 = vector.shape_cast %7 : vector<1x8x32xbf16> to vector<8x32xbf16>
    %cst_10 = arith.constant dense<0.000000e+00> : vector<8x32xf32>
    %9 = tpu.matmul %6, %8, %cst_10 {dimension_numbers = #tpu.dot_dimension_numbers<[1], [0], [0], [1], [0, 0, 1, 1], [], []>} : vector<8x8xbf16>, vector<8x32xbf16>, vector<8x32xf32> -> vector<8x32xf32>
    %10 = arith.addf %4, %9 : vector<8x32xf32>
    %c2 = arith.constant 2 : index
    %c0_11 = arith.constant 0 : index
    %c0_12 = arith.constant 0 : index
    %11 = vector.load %arg4[%c2, %c0_11, %c0_12] : memref<4x8x8xbf16, #tpu.memory_space<vmem>>, vector<1x8x8xbf16>
    %12 = vector.shape_cast %11 : vector<1x8x8xbf16> to vector<8x8xbf16>
    %c2_13 = arith.constant 2 : index
    %c0_14 = arith.constant 0 : index
    %c0_15 = arith.constant 0 : index
    %13 = vector.load %arg5[%c2_13, %c0_14, %c0_15] : memref<4x8x32xbf16, #tpu.memory_space<vmem>>, vector<1x8x32xbf16>
    %14 = vector.shape_cast %13 : vector<1x8x32xbf16> to vector<8x32xbf16>
    %cst_16 = arith.constant dense<0.000000e+00> : vector<8x32xf32>
    %15 = tpu.matmul %12, %14, %cst_16 {dimension_numbers = #tpu.dot_dimension_numbers<[1], [0], [0], [1], [0, 0, 1, 1], [], []>} : vector<8x8xbf16>, vector<8x32xbf16>, vector<8x32xf32> -> vector<8x32xf32>
    %16 = arith.addf %10, %15 : vector<8x32xf32>
    %c3 = arith.constant 3 : index
    %c0_17 = arith.constant 0 : index
    %c0_18 = arith.constant 0 : index
    %17 = vector.load %arg4[%c3, %c0_17, %c0_18] : memref<4x8x8xbf16, #tpu.memory_space<vmem>>, vector<1x8x8xbf16>
    %18 = vector.shape_cast %17 : vector<1x8x8xbf16> to vector<8x8xbf16>
    %c3_19 = arith.constant 3 : index
    %c0_20 = arith.constant 0 : index
    %c0_21 = arith.constant 0 : index
    %19 = vector.load %arg5[%c3_19, %c0_20, %c0_21] : memref<4x8x32xbf16, #tpu.memory_space<vmem>>, vector<1x8x32xbf16>
    %20 = vector.shape_cast %19 : vector<1x8x32xbf16> to vector<8x32xbf16>
    %cst_22 = arith.constant dense<0.000000e+00> : vector<8x32xf32>
    %21 = tpu.matmul %18, %20, %cst_22 {dimension_numbers = #tpu.dot_dimension_numbers<[1], [0], [0], [1], [0, 0, 1, 1], [], []>} : vector<8x8xbf16>, vector<8x32xbf16>, vector<8x32xf32> -> vector<8x32xf32>
    %22 = arith.addf %16, %21 : vector<8x32xf32>
    %c0_23 = arith.constant 0 : index
    %c0_24 = arith.constant 0 : index
    %23 = vector.load %arg6[%c0_23, %c0_24] : memref<1x32xbf16, #tpu.memory_space<vmem>>, vector<1x32xbf16>
    %24 = arith.extf %23 : vector<1x32xbf16> to vector<1x32xf32>
    %25 = vector.broadcast %24 : vector<1x32xf32> to vector<8x32xf32>
    %26 = arith.addf %22, %25 : vector<8x32xf32>
    %27 = arith.truncf %26 : vector<8x32xf32> to vector<8x32xbf16>
    %c0_25 = arith.constant 0 : index
    %c0_26 = arith.constant 0 : index
    %c0_27 = arith.constant 0 : index
    %28 = vector.load %arg7[%c0_25, %c0_26, %c0_27] : memref<1x8x32xbf16, #tpu.memory_space<vmem>>, vector<1x8x32xbf16>
    %29 = vector.shape_cast %28 : vector<1x8x32xbf16> to vector<8x32xbf16>
    %30 = vector.shape_cast %27 : vector<8x32xbf16> to vector<1x8x32xbf16>
    tpu.vector_store %arg7[%c0_25, %c0_26, %c0_27], %30 {strides = array<i32>} : memref<1x8x32xbf16, #tpu.memory_space<vmem>>, vector<1x8x32xbf16>,
    return
  }
  func.func @transform_0(%arg0: i32, %arg1: i32, %arg2: i32, %arg3: i32) -> (i32, i32, i32) {
    %c1_i32 = arith.constant 1 : i32
    %0 = arith.muli %arg0, %c1_i32 : i32
    %1 = arith.addi %0, %arg3 : i32
    %c0_i32 = arith.constant 0 : i32
    %c0_i32_0 = arith.constant 0 : i32
    return %1, %arg1, %c0_i32 : i32, i32, i32
  }
  func.func @transform_1(%arg0: i32, %arg1: i32, %arg2: i32, %arg3: i32) -> (i32, i32, i32) {
    %c0_i32 = arith.constant 0 : i32
    %c0_i32_0 = arith.constant 0 : i32
    return %arg3, %c0_i32, %arg2 : i32, i32, i32
  }
  func.func @transform_2(%arg0: i32, %arg1: i32, %arg2: i32, %arg3: i32) -> (i32, i32) {
    %c0_i32 = arith.constant 0 : i32
    %c0_i32_0 = arith.constant 0 : i32
    return %c0_i32, %arg2 : i32, i32
  }
  func.func @transform_3(%arg0: i32, %arg1: i32, %arg2: i32, %arg3: i32) -> (i32, i32, i32) {
    %c0_i32 = arith.constant 0 : i32
    return %arg0, %arg1, %arg2 : i32, i32, i32
  }
}

module attributes {stable_mosaic.version = 11 : i64} {
  func.func @kernel(%arg0: i32, %arg1: i32, %arg2: i32, %arg3: i32, %arg4: memref<1x8x32xbf16, #tpu.memory_space<vmem>>, %arg5: memref<32x96xbf16, #tpu.memory_space<vmem>>, %arg6: memref<1x96xbf16, #tpu.memory_space<vmem>>, %arg7: memref<3x4x8x8xbf16, #tpu.memory_space<vmem>>) attributes {dimension_semantics = [#tpu.dimension_semantics<parallel>, #tpu.dimension_semantics<parallel>, #tpu.dimension_semantics<parallel>, #tpu.dimension_semantics<arbitrary>], iteration_bounds = array<i64: 2, 1, 1, 1>, scalar_prefetch = 0 : i64, scratch_operands = 0 : i64, tpu.core_type = #tpu.core_type<tc>, window_params = [{transform_indices = @transform_0, window_bounds = array<i64: 1, 8, 32>}, {transform_indices = @transform_1, window_bounds = array<i64: 32, 96>}, {transform_indices = @transform_2, window_bounds = array<i64: 1, 96>}, {transform_indices = @transform_3, window_bounds = array<i64: 3, 4, 8, 8>}]} {
    %c0 = arith.constant 0 : index
    %c0_0 = arith.constant 0 : index
    %c0_1 = arith.constant 0 : index
    %0 = vector.load %arg4[%c0, %c0_0, %c0_1] : memref<1x8x32xbf16, #tpu.memory_space<vmem>>, vector<1x8x32xbf16>
    %1 = vector.shape_cast %0 : vector<1x8x32xbf16> to vector<8x32xbf16>
    %c0_2 = arith.constant 0 : index
    %c0_3 = arith.constant 0 : index
    %2 = vector.load %arg5[%c0_2, %c0_3] : memref<32x96xbf16, #tpu.memory_space<vmem>>, vector<32x96xbf16>
    %cst = arith.constant dense<0.000000e+00> : vector<8x96xf32>
    %3 = tpu.matmul %1, %2, %cst {dimension_numbers = #tpu.dot_dimension_numbers<[1], [0], [0], [1], [0, 0, 1, 1], [], []>} : vector<8x32xbf16>, vector<32x96xbf16>, vector<8x96xf32> -> vector<8x96xf32>
    %c0_4 = arith.constant 0 : index
    %c0_5 = arith.constant 0 : index
    %4 = vector.load %arg6[%c0_4, %c0_5] : memref<1x96xbf16, #tpu.memory_space<vmem>>, vector<1x96xbf16>
    %5 = arith.extf %4 : vector<1x96xbf16> to vector<1x96xf32>
    %6 = vector.broadcast %5 : vector<1x96xf32> to vector<8x96xf32>
    %7 = arith.addf %3, %6 : vector<8x96xf32>
    %8 = arith.truncf %7 : vector<8x96xf32> to vector<8x96xbf16>
    %9 = vector.extract_strided_slice %8 {offsets = [0, 0], sizes = [8, 8], strides = [1, 1]} : vector<8x96xbf16> to vector<8x8xbf16>
    %c0_6 = arith.constant 0 : index
    %c0_7 = arith.constant 0 : index
    %c0_8 = arith.constant 0 : index
    %c0_9 = arith.constant 0 : index
    %10 = vector.load %arg7[%c0_6, %c0_7, %c0_8, %c0_9] : memref<3x4x8x8xbf16, #tpu.memory_space<vmem>>, vector<1x1x8x8xbf16>
    %11 = vector.shape_cast %10 : vector<1x1x8x8xbf16> to vector<8x8xbf16>
    %12 = vector.shape_cast %9 : vector<8x8xbf16> to vector<1x1x8x8xbf16>
    tpu.vector_store %arg7[%c0_6, %c0_7, %c0_8, %c0_9], %12 {strides = array<i32>} : memref<3x4x8x8xbf16, #tpu.memory_space<vmem>>, vector<1x1x8x8xbf16>,
    %13 = vector.extract_strided_slice %8 {offsets = [0, 8], sizes = [8, 8], strides = [1, 1]} : vector<8x96xbf16> to vector<8x8xbf16>
    %c0_10 = arith.constant 0 : index
    %c1 = arith.constant 1 : index
    %c0_11 = arith.constant 0 : index
    %c0_12 = arith.constant 0 : index
    %14 = vector.load %arg7[%c0_10, %c1, %c0_11, %c0_12] : memref<3x4x8x8xbf16, #tpu.memory_space<vmem>>, vector<1x1x8x8xbf16>
    %15 = vector.shape_cast %14 : vector<1x1x8x8xbf16> to vector<8x8xbf16>
    %16 = vector.shape_cast %13 : vector<8x8xbf16> to vector<1x1x8x8xbf16>
    tpu.vector_store %arg7[%c0_10, %c1, %c0_11, %c0_12], %16 {strides = array<i32>} : memref<3x4x8x8xbf16, #tpu.memory_space<vmem>>, vector<1x1x8x8xbf16>,
    %17 = vector.extract_strided_slice %8 {offsets = [0, 16], sizes = [8, 8], strides = [1, 1]} : vector<8x96xbf16> to vector<8x8xbf16>
    %c0_13 = arith.constant 0 : index
    %c2 = arith.constant 2 : index
    %c0_14 = arith.constant 0 : index
    %c0_15 = arith.constant 0 : index
    %18 = vector.load %arg7[%c0_13, %c2, %c0_14, %c0_15] : memref<3x4x8x8xbf16, #tpu.memory_space<vmem>>, vector<1x1x8x8xbf16>
    %19 = vector.shape_cast %18 : vector<1x1x8x8xbf16> to vector<8x8xbf16>
    %20 = vector.shape_cast %17 : vector<8x8xbf16> to vector<1x1x8x8xbf16>
    tpu.vector_store %arg7[%c0_13, %c2, %c0_14, %c0_15], %20 {strides = array<i32>} : memref<3x4x8x8xbf16, #tpu.memory_space<vmem>>, vector<1x1x8x8xbf16>,
    %21 = vector.extract_strided_slice %8 {offsets = [0, 24], sizes = [8, 8], strides = [1, 1]} : vector<8x96xbf16> to vector<8x8xbf16>
    %c0_16 = arith.constant 0 : index
    %c3 = arith.constant 3 : index
    %c0_17 = arith.constant 0 : index
    %c0_18 = arith.constant 0 : index
    %22 = vector.load %arg7[%c0_16, %c3, %c0_17, %c0_18] : memref<3x4x8x8xbf16, #tpu.memory_space<vmem>>, vector<1x1x8x8xbf16>
    %23 = vector.shape_cast %22 : vector<1x1x8x8xbf16> to vector<8x8xbf16>
    %24 = vector.shape_cast %21 : vector<8x8xbf16> to vector<1x1x8x8xbf16>
    tpu.vector_store %arg7[%c0_16, %c3, %c0_17, %c0_18], %24 {strides = array<i32>} : memref<3x4x8x8xbf16, #tpu.memory_space<vmem>>, vector<1x1x8x8xbf16>,
    %25 = vector.extract_strided_slice %8 {offsets = [0, 32], sizes = [8, 8], strides = [1, 1]} : vector<8x96xbf16> to vector<8x8xbf16>
    %c1_19 = arith.constant 1 : index
    %c0_20 = arith.constant 0 : index
    %c0_21 = arith.constant 0 : index
    %c0_22 = arith.constant 0 : index
    %26 = vector.load %arg7[%c1_19, %c0_20, %c0_21, %c0_22] : memref<3x4x8x8xbf16, #tpu.memory_space<vmem>>, vector<1x1x8x8xbf16>
    %27 = vector.shape_cast %26 : vector<1x1x8x8xbf16> to vector<8x8xbf16>
    %28 = vector.shape_cast %25 : vector<8x8xbf16> to vector<1x1x8x8xbf16>
    tpu.vector_store %arg7[%c1_19, %c0_20, %c0_21, %c0_22], %28 {strides = array<i32>} : memref<3x4x8x8xbf16, #tpu.memory_space<vmem>>, vector<1x1x8x8xbf16>,
    %29 = vector.extract_strided_slice %8 {offsets = [0, 40], sizes = [8, 8], strides = [1, 1]} : vector<8x96xbf16> to vector<8x8xbf16>
    %c1_23 = arith.constant 1 : index
    %c1_24 = arith.constant 1 : index
    %c0_25 = arith.constant 0 : index
    %c0_26 = arith.constant 0 : index
    %30 = vector.load %arg7[%c1_23, %c1_24, %c0_25, %c0_26] : memref<3x4x8x8xbf16, #tpu.memory_space<vmem>>, vector<1x1x8x8xbf16>
    %31 = vector.shape_cast %30 : vector<1x1x8x8xbf16> to vector<8x8xbf16>
    %32 = vector.shape_cast %29 : vector<8x8xbf16> to vector<1x1x8x8xbf16>
    tpu.vector_store %arg7[%c1_23, %c1_24, %c0_25, %c0_26], %32 {strides = array<i32>} : memref<3x4x8x8xbf16, #tpu.memory_space<vmem>>, vector<1x1x8x8xbf16>,
    %33 = vector.extract_strided_slice %8 {offsets = [0, 48], sizes = [8, 8], strides = [1, 1]} : vector<8x96xbf16> to vector<8x8xbf16>
    %c1_27 = arith.constant 1 : index
    %c2_28 = arith.constant 2 : index
    %c0_29 = arith.constant 0 : index
    %c0_30 = arith.constant 0 : index
    %34 = vector.load %arg7[%c1_27, %c2_28, %c0_29, %c0_30] : memref<3x4x8x8xbf16, #tpu.memory_space<vmem>>, vector<1x1x8x8xbf16>
    %35 = vector.shape_cast %34 : vector<1x1x8x8xbf16> to vector<8x8xbf16>
    %36 = vector.shape_cast %33 : vector<8x8xbf16> to vector<1x1x8x8xbf16>
    tpu.vector_store %arg7[%c1_27, %c2_28, %c0_29, %c0_30], %36 {strides = array<i32>} : memref<3x4x8x8xbf16, #tpu.memory_space<vmem>>, vector<1x1x8x8xbf16>,
    %37 = vector.extract_strided_slice %8 {offsets = [0, 56], sizes = [8, 8], strides = [1, 1]} : vector<8x96xbf16> to vector<8x8xbf16>
    %c1_31 = arith.constant 1 : index
    %c3_32 = arith.constant 3 : index
    %c0_33 = arith.constant 0 : index
    %c0_34 = arith.constant 0 : index
    %38 = vector.load %arg7[%c1_31, %c3_32, %c0_33, %c0_34] : memref<3x4x8x8xbf16, #tpu.memory_space<vmem>>, vector<1x1x8x8xbf16>
    %39 = vector.shape_cast %38 : vector<1x1x8x8xbf16> to vector<8x8xbf16>
    %40 = vector.shape_cast %37 : vector<8x8xbf16> to vector<1x1x8x8xbf16>
    tpu.vector_store %arg7[%c1_31, %c3_32, %c0_33, %c0_34], %40 {strides = array<i32>} : memref<3x4x8x8xbf16, #tpu.memory_space<vmem>>, vector<1x1x8x8xbf16>,
    %41 = vector.extract_strided_slice %8 {offsets = [0, 64], sizes = [8, 8], strides = [1, 1]} : vector<8x96xbf16> to vector<8x8xbf16>
    %c2_35 = arith.constant 2 : index
    %c0_36 = arith.constant 0 : index
    %c0_37 = arith.constant 0 : index
    %c0_38 = arith.constant 0 : index
    %42 = vector.load %arg7[%c2_35, %c0_36, %c0_37, %c0_38] : memref<3x4x8x8xbf16, #tpu.memory_space<vmem>>, vector<1x1x8x8xbf16>
    %43 = vector.shape_cast %42 : vector<1x1x8x8xbf16> to vector<8x8xbf16>
    %44 = vector.shape_cast %41 : vector<8x8xbf16> to vector<1x1x8x8xbf16>
    tpu.vector_store %arg7[%c2_35, %c0_36, %c0_37, %c0_38], %44 {strides = array<i32>} : memref<3x4x8x8xbf16, #tpu.memory_space<vmem>>, vector<1x1x8x8xbf16>,
    %45 = vector.extract_strided_slice %8 {offsets = [0, 72], sizes = [8, 8], strides = [1, 1]} : vector<8x96xbf16> to vector<8x8xbf16>
    %c2_39 = arith.constant 2 : index
    %c1_40 = arith.constant 1 : index
    %c0_41 = arith.constant 0 : index
    %c0_42 = arith.constant 0 : index
    %46 = vector.load %arg7[%c2_39, %c1_40, %c0_41, %c0_42] : memref<3x4x8x8xbf16, #tpu.memory_space<vmem>>, vector<1x1x8x8xbf16>
    %47 = vector.shape_cast %46 : vector<1x1x8x8xbf16> to vector<8x8xbf16>
    %48 = vector.shape_cast %45 : vector<8x8xbf16> to vector<1x1x8x8xbf16>
    tpu.vector_store %arg7[%c2_39, %c1_40, %c0_41, %c0_42], %48 {strides = array<i32>} : memref<3x4x8x8xbf16, #tpu.memory_space<vmem>>, vector<1x1x8x8xbf16>,
    %49 = vector.extract_strided_slice %8 {offsets = [0, 80], sizes = [8, 8], strides = [1, 1]} : vector<8x96xbf16> to vector<8x8xbf16>
    %c2_43 = arith.constant 2 : index
    %c2_44 = arith.constant 2 : index
    %c0_45 = arith.constant 0 : index
    %c0_46 = arith.constant 0 : index
    %50 = vector.load %arg7[%c2_43, %c2_44, %c0_45, %c0_46] : memref<3x4x8x8xbf16, #tpu.memory_space<vmem>>, vector<1x1x8x8xbf16>
    %51 = vector.shape_cast %50 : vector<1x1x8x8xbf16> to vector<8x8xbf16>
    %52 = vector.shape_cast %49 : vector<8x8xbf16> to vector<1x1x8x8xbf16>
    tpu.vector_store %arg7[%c2_43, %c2_44, %c0_45, %c0_46], %52 {strides = array<i32>} : memref<3x4x8x8xbf16, #tpu.memory_space<vmem>>, vector<1x1x8x8xbf16>,
    %53 = vector.extract_strided_slice %8 {offsets = [0, 88], sizes = [8, 8], strides = [1, 1]} : vector<8x96xbf16> to vector<8x8xbf16>
    %c2_47 = arith.constant 2 : index
    %c3_48 = arith.constant 3 : index
    %c0_49 = arith.constant 0 : index
    %c0_50 = arith.constant 0 : index
    %54 = vector.load %arg7[%c2_47, %c3_48, %c0_49, %c0_50] : memref<3x4x8x8xbf16, #tpu.memory_space<vmem>>, vector<1x1x8x8xbf16>
    %55 = vector.shape_cast %54 : vector<1x1x8x8xbf16> to vector<8x8xbf16>
    %56 = vector.shape_cast %53 : vector<8x8xbf16> to vector<1x1x8x8xbf16>
    tpu.vector_store %arg7[%c2_47, %c3_48, %c0_49, %c0_50], %56 {strides = array<i32>} : memref<3x4x8x8xbf16, #tpu.memory_space<vmem>>, vector<1x1x8x8xbf16>,
    return
  }
  func.func @transform_0(%arg0: i32, %arg1: i32, %arg2: i32, %arg3: i32) -> (i32, i32, i32) {
    %c0_i32 = arith.constant 0 : i32
    return %arg0, %arg1, %arg3 : i32, i32, i32
  }
  func.func @transform_1(%arg0: i32, %arg1: i32, %arg2: i32, %arg3: i32) -> (i32, i32) {
    %c0_i32 = arith.constant 0 : i32
    return %arg3, %arg2 : i32, i32
  }
  func.func @transform_2(%arg0: i32, %arg1: i32, %arg2: i32, %arg3: i32) -> (i32, i32) {
    %c0_i32 = arith.constant 0 : i32
    %c0_i32_0 = arith.constant 0 : i32
    return %c0_i32, %arg2 : i32, i32
  }
  func.func @transform_3(%arg0: i32, %arg1: i32, %arg2: i32, %arg3: i32) -> (i32, i32, i32, i32) {
    %c0_i32 = arith.constant 0 : i32
    %c0_i32_0 = arith.constant 0 : i32
    %c0_i32_1 = arith.constant 0 : i32
    return %c0_i32, %arg0, %arg1, %c0_i32_0 : i32, i32, i32, i32
  }
}

</mosaic_0001>

<llo_original>
// kernel: _flash_mha_impl.5
$region0: #{_flash_mha_impl.5}
  #allocation0 [shape = 'u32[]', space=smem, size = 0x4, offset = 0x4, fixed_abs, tag = 'smem constant byte address 0x4 - core index']
  #allocation1 [shape = 'u32[144,128]{1,0:T(1,128)}', space=vmem, size = 0x12000, scoped, tag = 'internal scratch']
  %s0 = inlined_call_operand.vmem [shape: bf16[8,8,8], index: 0, kind: input, shape index: {}]
  %s1 = inlined_call_operand.vmem [shape: bf16[4,8,32], index: 1, kind: input, shape index: {}]
  %s2 = inlined_call_operand.vmem [shape: bf16[1,32], index: 2, kind: input, shape index: {}]
  %s3 = inlined_call_operand.hbm [shape: bf16[2,8,32], index: 3, kind: output, shape index: {}]
  %s4 = sld [smem:[#allocation0]]
  $region45: #{_flash_mha_impl.5} parent=0
    _
  %s6 = ssub.s32 1, %s4
  %s7 = scalar_select 0, %s6, %s4
  $region1: #{_flash_mha_impl.5} parent=0
    #allocation2 [shape = 'u8[4096]{0}', space=vmem, size = 0x1000, scoped, tag = 'output window, operand 0']
    #allocation3 [shape = 's32[2]{0}', space=sflag, size = 0x8, scoped, tag = 'scoped memory for _flash_mha_impl.5']
    %8 = vsyncpa [#allocation3], 0
    %s9 = scalar_lea.sflag [#allocation3], 1
    %10 = vsyncpa %s9, 0
    loop: start=0, step=1, limit=4
    $region2: #{_flash_mha_impl.5} parent=1 // loop_pre_header
      _
    $region3: #{_flash_mha_impl.5} parent=1 // loop_header
      %s12 = sphi 0, %s16
      %p13 = scmp.ge.s32.totalorder %s12, 4
      %s19 = sphi 0, %s45
      %s20 = sphi 0, %s41
      %s21 = sphi 0, %s37
      %s22 = sphi 0, %s33
      %s23 = sphi 0, %s19
      %s24 = sphi 0, %s20
      %s25 = sphi 0, %s21
      %s26 = sphi 0, %s22
      %s27 = sphi 0, %s23
      %s28 = sphi 0, %s24
      %s29 = sphi 0, %s25
      %s30 = sphi 0, %s26
      %s52 = sphi 0, %s54
      %s55 = sphi 0, %s52
      %s56 = sphi 0, %s55
      %s72 = sphi 0, %s56
      %s80 = sphi 0, %s82
      %s83 = sphi 0, %s80
      %s84 = sphi 0, %s83
      %s100 = sphi 0, %s84
      %s106 = sphi 0, %s108
      %s109 = sphi 0, %s106
      %s110 = sphi 0, %s109
      %s126 = sphi 0, %s110
      %s136 = sphi 0, %s138
      %s139 = sphi 0, %s136
      %s140 = sphi 0, %s139
      %s156 = sphi 0, %s140
    $region4: #{_flash_mha_impl.5} parent=1 // loop_header_branch
      %15 = sbr.rel (%p13) target = $region8
    $region5: #{_flash_mha_impl.5} parent=1 // loop_body
      %s17 = ssub.s32 %s12, 1
      %s18 = ssub.s32 %s12, 2
      %s31 = sadd.s32 1, %s22
      %p32 = scmp.ge.s32.totalorder %s31, 1
      %s33 = scalar_select %p32, 0, %s31
      %s34 = sadd.s32 1, %s21
      %s35 = scalar_select %p32, %s34, %s21
      %p36 = scmp.ge.s32.totalorder %s35, 1
      %s37 = scalar_select %p36, 0, %s35
      %s38 = sadd.s32 1, %s20
      %s39 = scalar_select %p36, %s38, %s20
      %p40 = scmp.ge.s32.totalorder %s39, 1
      %s41 = scalar_select %p40, 0, %s39
      %s42 = sadd.s32 1, %s19
      %s43 = scalar_select %p40, %s42, %s19
      %p44 = scmp.ge.s32.totalorder %s43, 2
      %s45 = scalar_select %p44, 0, %s43
      %s46 = sadd.s32 %s19, %s22
      %s47 = sadd.s32 %s45, %s33
      %s48 = ssub.s32 %s46, %s47
      %s49 = ssub.s32 %s20, %s41
      %s50 = sor.u32 %s48, %s49
      %p51 = scmp.eq.s32.totalorder %s50, 0
      %s53 = sadd.s32 %s52, 1
      %s54 = scalar_select %p51, %s52, %s53
      %p57 = pneg %p51
      %p58 = scmp.eq.s32.totalorder %s12, 1
      %p59 = por %p57, %p58
      %p60 = scmp.ne.s32.totalorder %s52, %s55
      %p61 = scmp.eq.s32.totalorder %s12, 0
      %p62 = por %p60, %p61
      %p63 = scmp.ne.s32.totalorder %s52, %s55
      %p64 = scmp.eq.s32.totalorder %s17, 1
      %p65 = por %p63, %p64
      %p66 = scmp.ne.s32.totalorder %s55, %s56
      %p67 = scmp.eq.s32.totalorder %s17, 0
      %p68 = por %p66, %p67
      %p69 = scmp.ne.s32.totalorder %s55, %s56
      %p70 = scmp.eq.s32.totalorder %s18, 1
      %p71 = por %p69, %p70
      %p73 = scmp.ne.s32.totalorder %s56, %s72
      %p74 = scmp.eq.s32.totalorder %s18, 0
      %p75 = por %p73, %p74
      %s76 = ssub.s32 %s22, %s33
      %s77 = ssub.s32 %s21, %s37
      %s78 = sor.u32 %s76, %s77
      %p79 = scmp.eq.s32.totalorder %s78, 0
      %s81 = sadd.s32 %s80, 1
      %s82 = scalar_select %p79, %s80, %s81
      %p85 = pneg %p79
      %p86 = scmp.eq.s32.totalorder %s12, 1
      %p87 = por %p85, %p86
      %p88 = scmp.ne.s32.totalorder %s80, %s83
      %p89 = scmp.eq.s32.totalorder %s12, 0
      %p90 = por %p88, %p89
      %p91 = scmp.ne.s32.totalorder %s80, %s83
      %p92 = scmp.eq.s32.totalorder %s17, 1
      %p93 = por %p91, %p92
      %p94 = scmp.ne.s32.totalorder %s83, %s84
      %p95 = scmp.eq.s32.totalorder %s17, 0
      %p96 = por %p94, %p95
      %p97 = scmp.ne.s32.totalorder %s83, %s84
      %p98 = scmp.eq.s32.totalorder %s18, 1
      %p99 = por %p97, %p98
      %p101 = scmp.ne.s32.totalorder %s84, %s100
      %p102 = scmp.eq.s32.totalorder %s18, 0
      %p103 = por %p101, %p102
      %s104 = ssub.s32 %s21, %s37
      %p105 = scmp.eq.s32.totalorder %s104, 0
      %s107 = sadd.s32 %s106, 1
      %s108 = scalar_select %p105, %s106, %s107
      %p111 = pneg %p105
      %p112 = scmp.eq.s32.totalorder %s12, 1
      %p113 = por %p111, %p112
      %p114 = scmp.ne.s32.totalorder %s106, %s109
      %p115 = scmp.eq.s32.totalorder %s12, 0
      %p116 = por %p114, %p115
      %p117 = scmp.ne.s32.totalorder %s106, %s109
      %p118 = scmp.eq.s32.totalorder %s17, 1
      %p119 = por %p117, %p118
      %p120 = scmp.ne.s32.totalorder %s109, %s110
      %p121 = scmp.eq.s32.totalorder %s17, 0
      %p122 = por %p120, %p121
      %p123 = scmp.ne.s32.totalorder %s109, %s110
      %p124 = scmp.eq.s32.totalorder %s18, 1
      %p125 = por %p123, %p124
      %p127 = scmp.ne.s32.totalorder %s110, %s126
      %p128 = scmp.eq.s32.totalorder %s18, 0
      %p129 = por %p127, %p128
      %s130 = ssub.s32 %s19, %s45
      %s131 = ssub.s32 %s20, %s41
      %s132 = sor.u32 %s130, %s131
      %s133 = ssub.s32 %s21, %s37
      %s134 = sor.u32 %s132, %s133
      %p135 = scmp.eq.s32.totalorder %s134, 0
      %s137 = sadd.s32 %s136, 1
      %s138 = scalar_select %p135, %s136, %s137
      %p141 = pneg %p135
      %p142 = scmp.eq.s32.totalorder %s12, 1
      %p143 = por %p141, %p142
      %p144 = scmp.ne.s32.totalorder %s136, %s139
      %p145 = scmp.eq.s32.totalorder %s12, 0
      %p146 = por %p144, %p145
      %p147 = scmp.ne.s32.totalorder %s136, %s139
      %p148 = scmp.eq.s32.totalorder %s17, 1
      %p149 = por %p147, %p148
      %p150 = scmp.ne.s32.totalorder %s139, %s140
      %p151 = scmp.eq.s32.totalorder %s17, 0
      %p152 = por %p150, %p151
      %p153 = scmp.ne.s32.totalorder %s139, %s140
      %p154 = scmp.eq.s32.totalorder %s18, 1
      %p155 = por %p153, %p154
      %p157 = scmp.ne.s32.totalorder %s140, %s156
      %p158 = scmp.eq.s32.totalorder %s18, 0
      %p159 = por %p157, %p158
      %p160 = scmp.le.s32.totalorder 1, %s12
      %p161 = scmp.lt.s32.totalorder %s12, 3
      %p162 = pnand %p160, %p161
      %p163 = pneg %p162
      // Predicated region
      $region9: #{_flash_mha_impl.5} parent=5 // pred_check
        _
      $region10: #{_flash_mha_impl.5} parent=5 // pred_check_branch
        %165 = sbr.rel (%p162) target = $region12
      $region11: #{_flash_mha_impl.5} parent=5 // pred_region
        %s166 = ssub.s32 %s12, 1
        // Predicated region
        $region13: #{_flash_mha_impl.5} parent=11 // pred_check
          %p167 = pneg %p96
        $region14: #{_flash_mha_impl.5} parent=11 // pred_check_branch
          %169 = sbr.rel (%p167) target = $region16
        $region15: #{_flash_mha_impl.5} parent=11 // pred_region
          %s170 = smul.u32 4, %s26
          %p171 = scmp.lt.s32.totalorder %s170, 3
          %s172 = scalar_select %p171, %s170, 3
          %p173 = scmp.lt.s32.totalorder %s25, 0
          %s174 = scalar_select %p173, %s25, 0
          %s175 = sadd.s32 %s174, %s172
          %s176 = smul.addr %s175, 4
          %s177 = scalar_lea.vmem %s1, %s176
          %s178 = smul.u32 4, %s26
        $region16: #{_flash_mha_impl.5} parent=11 // pred_fallthru
          _
        // Predicated region
        $region17: #{_flash_mha_impl.5} parent=11 // pred_check
          %p179 = pneg %p122
        $region18: #{_flash_mha_impl.5} parent=11 // pred_check_branch
          %181 = sbr.rel (%p179) target = $region20
        $region19: #{_flash_mha_impl.5} parent=11 // pred_region
          %p182 = scmp.lt.s32.totalorder %s25, 0
          %s183 = scalar_select %p182, %s25, 0
          %s184 = scalar_lea.vmem %s2, %s183
        $region20: #{_flash_mha_impl.5} parent=11 // pred_fallthru
          _
      $region12: #{_flash_mha_impl.5} parent=5 // pred_fallthru
        _
      %p185 = scmp.lt.s32.totalorder %s12, 2
      // Predicated region
      $region21: #{_flash_mha_impl.5} parent=5 // pred_check
        %p186 = pneg %p185
      $region22: #{_flash_mha_impl.5} parent=5 // pred_check_branch
        %188 = sbr.rel (%p186) target = $region24
      $region23: #{_flash_mha_impl.5} parent=5 // pred_region
        // Predicated region
        $region25: #{_flash_mha_impl.5} parent=23 // pred_check
          %p189 = pneg %p62
        $region26: #{_flash_mha_impl.5} parent=23 // pred_check_branch
          %191 = sbr.rel (%p189) target = $region28
        $region27: #{_flash_mha_impl.5} parent=23 // pred_region
          %s192 = sadd.s32 %s19, %s22
          %s193 = smul.u32 4, %s192
          %p194 = scmp.lt.s32.totalorder %s193, 7
          %s195 = scalar_select %p194, %s193, 7
          %p196 = scmp.lt.s32.totalorder %s20, 0
          %s197 = scalar_select %p196, %s20, 0
          %s198 = sadd.s32 %s197, %s195
          %s199 = smul.addr %s198, 4
          %s200 = scalar_lea.vmem %s0, %s199
          %s201 = sadd.s32 %s19, %s22
          %s202 = smul.u32 4, %s201
        $region28: #{_flash_mha_impl.5} parent=23 // pred_fallthru
          _
      $region24: #{_flash_mha_impl.5} parent=5 // pred_fallthru
        _
      %p203 = scmp.le.s32.totalorder 1, %s12
      %p204 = scmp.lt.s32.totalorder %s12, 3
      %p205 = pnand %p203, %p204
      %p206 = pneg %p205
      // Predicated region
      $region29: #{_flash_mha_impl.5} parent=5 // pred_check
        _
      $region30: #{_flash_mha_impl.5} parent=5 // pred_check_branch
        %208 = sbr.rel (%p205) target = $region32
      $region31: #{_flash_mha_impl.5} parent=5 // pred_region
        %s209 = ssub.s32 %s12, 1
        %s210 = sadd.s32 %s23, %s26
        %s211 = smul.u32 4, %s210
        %p212 = scmp.lt.s32.totalorder %s211, 7
        %s213 = scalar_select %p212, %s211, 7
        %p214 = scmp.lt.s32.totalorder %s24, 0
        %s215 = scalar_select %p214, %s24, 0
        %s216 = sadd.s32 %s215, %s213
        %s217 = smul.addr %s216, 4
        %s218 = scalar_lea.vmem %s0, %s217
        %p219 = pneg %p68
        %p220 = pneg %p65
        %s221 = smul.u32 4, %s26
        %p222 = scmp.lt.s32.totalorder %s221, 3
        %s223 = scalar_select %p222, %s221, 3
        %p224 = scmp.lt.s32.totalorder %s25, 0
        %s225 = scalar_select %p224, %s25, 0
        %s226 = sadd.s32 %s225, %s223
        %s227 = smul.addr %s226, 4
        %s228 = scalar_lea.vmem %s1, %s227
        %p229 = pneg %p96
        %p230 = pneg %p93
        %p231 = scmp.lt.s32.totalorder %s25, 0
        %s232 = scalar_select %p231, %s25, 0
        %s233 = scalar_lea.vmem %s2, %s232
        %p234 = pneg %p122
        %p235 = pneg %p119
        %p236 = pneg %p152
        %p237 = pneg %p149
        %s238 = sand.u32 %s139, 1
        %s239 = scalar_lea.sflag [#allocation3], %s238
        %s240 = sand.u32 %s139, 1
        %s241 = smul.addr %s240, 4
        %s242 = scalar_lea.vmem [#allocation2], %s241
        %s243 = sadd.s32 %s23, %s26
        %s244 = smul.u32 4, %s243
        %p245 = scmp.lt.s32.totalorder %s244, 7
        %s246 = scalar_select %p245, %s244, 7
        %p247 = scmp.lt.s32.totalorder %s24, 0
        %s248 = scalar_select %p247, %s24, 0
        %s249 = sadd.s32 %s248, %s246
        %s250 = smul.addr %s249, 4
        %s251 = scalar_lea.vmem %s0, %s250
        %s252 = sadd.s32 %s23, %s26
        %s253 = smul.u32 4, %s252
        %s254 = smul.u32 4, %s26
        %p255 = scmp.lt.s32.totalorder %s254, 3
        %s256 = scalar_select %p255, %s254, 3
        %p257 = scmp.lt.s32.totalorder %s25, 0
        %s258 = scalar_select %p257, %s25, 0
        %s259 = sadd.s32 %s258, %s256
        %s260 = smul.addr %s259, 4
        %s261 = scalar_lea.vmem %s1, %s260
        %s262 = smul.u32 4, %s26
        %p263 = scmp.lt.s32.totalorder %s25, 0
        %s264 = scalar_select %p263, %s25, 0
        %s265 = scalar_lea.vmem %s2, %s264
        %v267 = vld [vmem:[%s251] sm:$0xf]
        %v268 = vld [vmem:[%s261] sm:$0xf]
        %s269 = scalar_lea.vmem %s251, 4
        %v270 = vld [vmem:[%s269] sm:$0xf]
        %s271 = scalar_lea.vmem %s261, 4
        %v272 = vld [vmem:[%s271] sm:$0xf]
        %vm273 = vcmask 64512
        %v275 = vsel %vm273, %v270, 0
        %vm277 = vcmask 1043456
        %v279 = vsel %vm277, %v272, 0
        %281 = vmatprep.subr.bf16.mxu0 0
        %282 = vmatpush1.bf16.msra.mxu0 0
        %283 = vmatprep.subr.bf16.mxu0 0
        %284 = vmatpush1.bf16.msra.mxu0 0
        %285 = vmatprep.subr.bf16.mxu0 0
        %286 = vmatpush1.bf16.msra.mxu0 0
        %287 = vmatprep.subr.bf16.mxu0 0
        %288 = vmatpush1.bf16.msra.mxu0 0
        %289 = vmatprep.subr.bf16.mxu0 0
        %290 = vmatpush1.bf16.msra.mxu0 0
        %291 = vmatprep.subr.bf16.mxu0 0
        %292 = vmatpush1.bf16.msra.mxu0 0
        %293 = vmatprep.subr.bf16.mxu0 0
        %294 = vmatpush1.bf16.msra.mxu0 0
        %295 = vmatprep.subr.bf16.mxu0 0
        %296 = vmatpush1.bf16.msra.mxu0 %v279
        %297 = vmatprep.subr.bf16.mxu0 0
        %298 = vmatpush2.bf16.msra.mxu0 0
        %299 = vmatprep.subr.bf16.mxu0 0
        %300 = vmatpush2.bf16.msra.mxu0 0
        %301 = vmatprep.subr.bf16.mxu0 0
        %302 = vmatpush2.bf16.msra.mxu0 0
        %303 = vmatprep.subr.bf16.mxu0 0
        %304 = vmatpush2.bf16.msra.mxu0 0
        %305 = vmatprep.subr.bf16.mxu0 0
        %306 = vmatpush2.bf16.msra.mxu0 0
        %307 = vmatprep.subr.bf16.mxu0 0
        %308 = vmatpush2.bf16.msra.mxu0 0
        %309 = vmatprep.subr.bf16.mxu0 0
        %310 = vmatpush2.bf16.msra.mxu0 0
        %311 = vmatprep.subr.bf16.mxu0 0
        %312 = vmatpush2.bf16.msra.mxu0 0
        %313 = vmatprep.mubr.bf16.mxu0 0
        %314 = vmatmul.mubr.bf16.gmra.mxu0 %v275
        %v315 = vpop.f32.mrf.mxu0
        %v316 = vadd.f32 0.0, %v315
        %v317 = vpop.f32.mrf.mxu0
        %v318 = vpop.f32.mrf.mxu0
        %v319 = vpop.f32.mrf.mxu0
        %320 = vdwg.mxu0
        %v322 = vsel %vm273, %v267, 0
        %v325 = vsel %vm277, %v268, 0
        %327 = vmatprep.subr.bf16.mxu0 0
        %328 = vmatpush1.bf16.msra.mxu0 0
        %329 = vmatprep.subr.bf16.mxu0 0
        %330 = vmatpush1.bf16.msra.mxu0 0
        %331 = vmatprep.subr.bf16.mxu0 0
        %332 = vmatpush1.bf16.msra.mxu0 0
        %333 = vmatprep.subr.bf16.mxu0 0
        %334 = vmatpush1.bf16.msra.mxu0 0
        %335 = vmatprep.subr.bf16.mxu0 0
        %336 = vmatpush1.bf16.msra.mxu0 0
        %337 = vmatprep.subr.bf16.mxu0 0
        %338 = vmatpush1.bf16.msra.mxu0 0
        %339 = vmatprep.subr.bf16.mxu0 0
        %340 = vmatpush1.bf16.msra.mxu0 0
        %341 = vmatprep.subr.bf16.mxu0 0
        %342 = vmatpush1.bf16.msra.mxu0 %v325
        %343 = vmatprep.subr.bf16.mxu0 0
        %344 = vmatpush2.bf16.msra.mxu0 0
        %345 = vmatprep.subr.bf16.mxu0 0
        %346 = vmatpush2.bf16.msra.mxu0 0
        %347 = vmatprep.subr.bf16.mxu0 0
        %348 = vmatpush2.bf16.msra.mxu0 0
        %349 = vmatprep.subr.bf16.mxu0 0
        %350 = vmatpush2.bf16.msra.mxu0 0
        %351 = vmatprep.subr.bf16.mxu0 0
        %352 = vmatpush2.bf16.msra.mxu0 0
        %353 = vmatprep.subr.bf16.mxu0 0
        %354 = vmatpush2.bf16.msra.mxu0 0
        %355 = vmatprep.subr.bf16.mxu0 0
        %356 = vmatpush2.bf16.msra.mxu0 0
        %357 = vmatprep.subr.bf16.mxu0 0
        %358 = vmatpush2.bf16.msra.mxu0 0
        %359 = vmatprep.mubr.bf16.mxu0 0
        %360 = vmatmul.mubr.bf16.gmra.mxu0 %v322
        %v361 = vpop.f32.mrf.mxu0
        %v362 = vadd.f32 %v316, %v361
        %v363 = vpop.f32.mrf.mxu0
        %v364 = vpop.f32.mrf.mxu0
        %v365 = vpop.f32.mrf.mxu0
        %366 = vdwg.mxu0
        %s367 = scalar_lea.vmem %s251, 8
        %v368 = vld [vmem:[%s367] sm:$0xf]
        %s369 = scalar_lea.vmem %s261, 8
        %v370 = vld [vmem:[%s369] sm:$0xf]
        %v372 = vsel %vm273, %v368, 0
        %v375 = vsel %vm277, %v370, 0
        %377 = vmatprep.subr.bf16.mxu0 0
        %378 = vmatpush1.bf16.msra.mxu0 0
        %379 = vmatprep.subr.bf16.mxu0 0
        %380 = vmatpush1.bf16.msra.mxu0 0
        %381 = vmatprep.subr.bf16.mxu0 0
        %382 = vmatpush1.bf16.msra.mxu0 0
        %383 = vmatprep.subr.bf16.mxu0 0
        %384 = vmatpush1.bf16.msra.mxu0 0
        %385 = vmatprep.subr.bf16.mxu0 0
        %386 = vmatpush1.bf16.msra.mxu0 0
        %387 = vmatprep.subr.bf16.mxu0 0
        %388 = vmatpush1.bf16.msra.mxu0 0
        %389 = vmatprep.subr.bf16.mxu0 0
        %390 = vmatpush1.bf16.msra.mxu0 0
        %391 = vmatprep.subr.bf16.mxu0 0
        %392 = vmatpush1.bf16.msra.mxu0 %v375
        %393 = vmatprep.subr.bf16.mxu0 0
        %394 = vmatpush2.bf16.msra.mxu0 0
        %395 = vmatprep.subr.bf16.mxu0 0
        %396 = vmatpush2.bf16.msra.mxu0 0
        %397 = vmatprep.subr.bf16.mxu0 0
        %398 = vmatpush2.bf16.msra.mxu0 0
        %399 = vmatprep.subr.bf16.mxu0 0
        %400 = vmatpush2.bf16.msra.mxu0 0
        %401 = vmatprep.subr.bf16.mxu0 0
        %402 = vmatpush2.bf16.msra.mxu0 0
        %403 = vmatprep.subr.bf16.mxu0 0
        %404 = vmatpush2.bf16.msra.mxu0 0
        %405 = vmatprep.subr.bf16.mxu0 0
        %406 = vmatpush2.bf16.msra.mxu0 0
        %407 = vmatprep.subr.bf16.mxu0 0
        %408 = vmatpush2.bf16.msra.mxu0 0
        %409 = vmatprep.mubr.bf16.mxu0 0
        %410 = vmatmul.mubr.bf16.gmra.mxu0 %v372
        %v411 = vpop.f32.mrf.mxu0
        %v412 = vadd.f32 0.0, %v411
        %v413 = vpop.f32.mrf.mxu0
        %v414 = vpop.f32.mrf.mxu0
        %v415 = vpop.f32.mrf.mxu0
        %416 = vdwg.mxu0
        %v417 = vadd.f32 %v362, %v412
        %s418 = scalar_lea.vmem %s251, 12
        %v419 = vld [vmem:[%s418] sm:$0xf]
        %s420 = scalar_lea.vmem %s261, 12
        %v421 = vld [vmem:[%s420] sm:$0xf]
        %v423 = vsel %vm273, %v419, 0
        %v426 = vsel %vm277, %v421, 0
        %428 = vmatprep.subr.bf16.mxu0 0
        %429 = vmatpush1.bf16.msra.mxu0 0
        %430 = vmatprep.subr.bf16.mxu0 0
        %431 = vmatpush1.bf16.msra.mxu0 0
        %432 = vmatprep.subr.bf16.mxu0 0
        %433 = vmatpush1.bf16.msra.mxu0 0
        %434 = vmatprep.subr.bf16.mxu0 0
        %435 = vmatpush1.bf16.msra.mxu0 0
        %436 = vmatprep.subr.bf16.mxu0 0
        %437 = vmatpush1.bf16.msra.mxu0 0
        %438 = vmatprep.subr.bf16.mxu0 0
        %439 = vmatpush1.bf16.msra.mxu0 0
        %440 = vmatprep.subr.bf16.mxu0 0
        %441 = vmatpush1.bf16.msra.mxu0 0
        %442 = vmatprep.subr.bf16.mxu0 0
        %443 = vmatpush1.bf16.msra.mxu0 %v426
        %444 = vmatprep.subr.bf16.mxu0 0
        %445 = vmatpush2.bf16.msra.mxu0 0
        %446 = vmatprep.subr.bf16.mxu0 0
        %447 = vmatpush2.bf16.msra.mxu0 0
        %448 = vmatprep.subr.bf16.mxu0 0
        %449 = vmatpush2.bf16.msra.mxu0 0
        %450 = vmatprep.subr.bf16.mxu0 0
        %451 = vmatpush2.bf16.msra.mxu0 0
        %452 = vmatprep.subr.bf16.mxu0 0
        %453 = vmatpush2.bf16.msra.mxu0 0
        %454 = vmatprep.subr.bf16.mxu0 0
        %455 = vmatpush2.bf16.msra.mxu0 0
        %456 = vmatprep.subr.bf16.mxu0 0
        %457 = vmatpush2.bf16.msra.mxu0 0
        %458 = vmatprep.subr.bf16.mxu0 0
        %459 = vmatpush2.bf16.msra.mxu0 0
        %460 = vmatprep.mubr.bf16.mxu0 0
        %461 = vmatmul.mubr.bf16.gmra.mxu0 %v423
        %v462 = vpop.f32.mrf.mxu0
        %v463 = vadd.f32 0.0, %v462
        %v464 = vpop.f32.mrf.mxu0
        %v465 = vpop.f32.mrf.mxu0
        %v466 = vpop.f32.mrf.mxu0
        %467 = vdwg.mxu0
        %v468 = vadd.f32 %v417, %v463
        %v469 = vld [vmem:[%s265] sm:$0x1]
        %v470 = vunpack.c.l.bf16 %v469
        %v471 = vlaneseq
        %v472 = vshrl.u32 %v471, 7
        %v473 = vsub.s32 0, %v472
        %v474 = vrot.slane %v470, %v473
        %v475 = vadd.f32 %v468, %v474
        %v476 = vpack.c.bf16 %v475, %v475
        %vm477 = vcmask 257024
        %478 = vst.msk [vmem:[%s242] sm:$0xf] %vm477, %v476
        %s479 = sand.u32 %s139, 1
        %s480 = scalar_lea.sflag [#allocation3], %s479
        %s481 = sand.u32 %s139, 1
        %s482 = smul.addr %s481, 4
        %s483 = scalar_lea.vmem [#allocation2], %s482
        // Predicated region
        $region33: #{_flash_mha_impl.5} parent=31 // pred_check
          %p484 = pneg %p149
        $region34: #{_flash_mha_impl.5} parent=31 // pred_check_branch
          %486 = sbr.rel (%p484) target = $region36
        $region35: #{_flash_mha_impl.5} parent=31 // pred_region
          %s488 = ssub.s32 64, 64
          %489 = vsyncadd %s480, %s488
          %s490 = sadd.s32 %s25, %s24
          %s491 = sadd.s32 %s490, %s23
          %s492 = smul.addr %s491, 64
          %s493 = scalar_lea.hbm %s3, %s492
          %s495 = sshll.u32 %s483, 4
          %s496 = int_to_ptr.vmem [resolvable:$true] %s495
          %498 = dma.vmem_to_hbm [thread:$0]  %s496, 64, %s493, %s480
        $region36: #{_flash_mha_impl.5} parent=31 // pred_fallthru
          _
      $region32: #{_flash_mha_impl.5} parent=5 // pred_fallthru
        _
      %p499 = scmp.le.s32.totalorder 2, %s12
      // Predicated region
      $region37: #{_flash_mha_impl.5} parent=5 // pred_check
        %p500 = pneg %p499
      $region38: #{_flash_mha_impl.5} parent=5 // pred_check_branch
        %502 = sbr.rel (%p500) target = $region40
      $region39: #{_flash_mha_impl.5} parent=5 // pred_region
        %s503 = ssub.s32 %s12, 2
        // Predicated region
        $region41: #{_flash_mha_impl.5} parent=39 // pred_check
          %p504 = pneg %p155
        $region42: #{_flash_mha_impl.5} parent=39 // pred_check_branch
          %506 = sbr.rel (%p504) target = $region44
        $region43: #{_flash_mha_impl.5} parent=39 // pred_region
          %s507 = sand.u32 %s140, 1
          %s508 = scalar_lea.sflag [#allocation3], %s507
          %s509 = sand.u32 %s140, 1
          %s510 = smul.addr %s509, 4
          %s511 = scalar_lea.vmem [#allocation2], %s510
          %512 = dma.done %s508, 64
        $region44: #{_flash_mha_impl.5} parent=39 // pred_fallthru
          _
      $region40: #{_flash_mha_impl.5} parent=5 // pred_fallthru
        _
    $region6: #{_flash_mha_impl.5} parent=1 // loop_footer
      %s16 = sadd.s32 1, %s12
    $region7: #{_flash_mha_impl.5} parent=1 // loop_footer_branch
      %11 = sbr.rel target = $region3
    $region8: #{_flash_mha_impl.5} parent=1 // loop_exit
      _
    %513 = vsyncpa [#allocation3], 1
    %s514 = scalar_lea.sflag [#allocation3], 1
    %515 = vsyncpa %s514, 1

// kernel: _flash_mha_impl.3
$region0: #{_flash_mha_impl.3}
  #allocation0 [shape = 'u32[]', space=smem, size = 0x4, offset = 0x4, fixed_abs, tag = 'smem constant byte address 0x4 - core index']
  #allocation1 [shape = 'u32[144,128]{1,0:T(1,128)}', space=vmem, size = 0x12000, scoped, tag = 'internal scratch']
  %s0 = inlined_call_operand.hbm [shape: bf16[2,8,32], index: 0, kind: input, shape index: {}]
  %s1 = inlined_call_operand.hbm [shape: bf16[32,96], index: 1, kind: input, shape index: {}]
  %s2 = inlined_call_operand.vmem [shape: bf16[1,96], index: 2, kind: input, shape index: {}]
  %s3 = inlined_call_operand.vmem [shape: bf16[3,8,8,8], index: 3, kind: output, shape index: {}]
  %s4 = sld [smem:[#allocation0]]
  $region90: #{_flash_mha_impl.3} parent=0
    _
  %s6 = ssub.s32 1, %s4
  %s7 = scalar_select 0, %s6, %s4
  $region1: #{_flash_mha_impl.3} parent=0
    #allocation2 [shape = 'u8[4096]{0}', space=vmem, size = 0x1000, scoped, tag = 'input window, operand 0']
    #allocation3 [shape = 's32[2]{0}', space=sflag, size = 0x8, scoped, tag = 'scoped memory for _flash_mha_impl.3']
    #allocation4 [shape = 'u8[8192]{0}', space=vmem, size = 0x2000, scoped, tag = 'input window, operand 1, single buffered']
    #allocation5 [shape = 's32[1]{0}', space=sflag, size = 0x4, scoped, tag = 'scoped memory for _flash_mha_impl.3']
    #allocation6 [shape = 'u8[49152]{0}', space=vmem, size = 0xc000, scoped, tag = 'output window, operand 0']
    %8 = vsyncpa [#allocation3], 0
    %s9 = scalar_lea.sflag [#allocation3], 1
    %10 = vsyncpa %s9, 0
    %11 = vsyncpa [#allocation5], 0
    loop: start=0, step=1, limit=4
    $region2: #{_flash_mha_impl.3} parent=1 // loop_pre_header
      _
    $region3: #{_flash_mha_impl.3} parent=1 // loop_header
      %s13 = sphi 0, %s17
      %p14 = scmp.ge.s32.totalorder %s13, 4
      %s20 = sphi 0, %s46
      %s21 = sphi 0, %s42
      %s22 = sphi 0, %s38
      %s23 = sphi 0, %s34
      %s24 = sphi 0, %s20
      %s25 = sphi 0, %s21
      %s26 = sphi 0, %s22
      %s27 = sphi 0, %s23
      %s28 = sphi 0, %s24
      %s29 = sphi 0, %s25
      %s30 = sphi 0, %s26
      %s31 = sphi 0, %s27
      %s53 = sphi 0, %s55
      %s56 = sphi 0, %s53
      %s57 = sphi 0, %s56
      %s73 = sphi 0, %s57
      %s81 = sphi 0, %s83
      %s84 = sphi 0, %s81
      %s85 = sphi 0, %s84
      %s101 = sphi 0, %s85
      %s107 = sphi 0, %s109
      %s110 = sphi 0, %s107
      %s111 = sphi 0, %s110
      %s127 = sphi 0, %s111
      %s135 = sphi 0, %s137
      %s138 = sphi 0, %s135
      %s139 = sphi 0, %s138
      %s155 = sphi 0, %s139
    $region4: #{_flash_mha_impl.3} parent=1 // loop_header_branch
      %16 = sbr.rel (%p14) target = $region8
    $region5: #{_flash_mha_impl.3} parent=1 // loop_body
      %s18 = ssub.s32 %s13, 1
      %s19 = ssub.s32 %s13, 2
      %s32 = sadd.s32 1, %s23
      %p33 = scmp.ge.s32.totalorder %s32, 1
      %s34 = scalar_select %p33, 0, %s32
      %s35 = sadd.s32 1, %s22
      %s36 = scalar_select %p33, %s35, %s22
      %p37 = scmp.ge.s32.totalorder %s36, 1
      %s38 = scalar_select %p37, 0, %s36
      %s39 = sadd.s32 1, %s21
      %s40 = scalar_select %p37, %s39, %s21
      %p41 = scmp.ge.s32.totalorder %s40, 1
      %s42 = scalar_select %p41, 0, %s40
      %s43 = sadd.s32 1, %s20
      %s44 = scalar_select %p41, %s43, %s20
      %p45 = scmp.ge.s32.totalorder %s44, 2
      %s46 = scalar_select %p45, 0, %s44
      %s47 = ssub.s32 %s20, %s46
      %s48 = ssub.s32 %s21, %s42
      %s49 = sor.u32 %s47, %s48
      %s50 = ssub.s32 %s23, %s34
      %s51 = sor.u32 %s49, %s50
      %p52 = scmp.eq.s32.totalorder %s51, 0
      %s54 = sadd.s32 %s53, 1
      %s55 = scalar_select %p52, %s53, %s54
      %p58 = pneg %p52
      %p59 = scmp.eq.s32.totalorder %s13, 1
      %p60 = por %p58, %p59
      %p61 = scmp.ne.s32.totalorder %s53, %s56
      %p62 = scmp.eq.s32.totalorder %s13, 0
      %p63 = por %p61, %p62
      %p64 = scmp.ne.s32.totalorder %s53, %s56
      %p65 = scmp.eq.s32.totalorder %s18, 1
      %p66 = por %p64, %p65
      %p67 = scmp.ne.s32.totalorder %s56, %s57
      %p68 = scmp.eq.s32.totalorder %s18, 0
      %p69 = por %p67, %p68
      %p70 = scmp.ne.s32.totalorder %s56, %s57
      %p71 = scmp.eq.s32.totalorder %s19, 1
      %p72 = por %p70, %p71
      %p74 = scmp.ne.s32.totalorder %s57, %s73
      %p75 = scmp.eq.s32.totalorder %s19, 0
      %p76 = por %p74, %p75
      %s77 = ssub.s32 %s23, %s34
      %s78 = ssub.s32 %s22, %s38
      %s79 = sor.u32 %s77, %s78
      %p80 = scmp.eq.s32.totalorder %s79, 0
      %s82 = sadd.s32 %s81, 1
      %s83 = scalar_select %p80, %s81, %s82
      %p86 = pneg %p80
      %p87 = scmp.eq.s32.totalorder %s13, 1
      %p88 = por %p86, %p87
      %p89 = scmp.ne.s32.totalorder %s81, %s84
      %p90 = scmp.eq.s32.totalorder %s13, 0
      %p91 = por %p89, %p90
      %p92 = scmp.ne.s32.totalorder %s81, %s84
      %p93 = scmp.eq.s32.totalorder %s18, 1
      %p94 = por %p92, %p93
      %p95 = scmp.ne.s32.totalorder %s84, %s85
      %p96 = scmp.eq.s32.totalorder %s18, 0
      %p97 = por %p95, %p96
      %p98 = scmp.ne.s32.totalorder %s84, %s85
      %p99 = scmp.eq.s32.totalorder %s19, 1
      %p100 = por %p98, %p99
      %p102 = scmp.ne.s32.totalorder %s85, %s101
      %p103 = scmp.eq.s32.totalorder %s19, 0
      %p104 = por %p102, %p103
      %s105 = ssub.s32 %s22, %s38
      %p106 = scmp.eq.s32.totalorder %s105, 0
      %s108 = sadd.s32 %s107, 1
      %s109 = scalar_select %p106, %s107, %s108
      %p112 = pneg %p106
      %p113 = scmp.eq.s32.totalorder %s13, 1
      %p114 = por %p112, %p113
      %p115 = scmp.ne.s32.totalorder %s107, %s110
      %p116 = scmp.eq.s32.totalorder %s13, 0
      %p117 = por %p115, %p116
      %p118 = scmp.ne.s32.totalorder %s107, %s110
      %p119 = scmp.eq.s32.totalorder %s18, 1
      %p120 = por %p118, %p119
      %p121 = scmp.ne.s32.totalorder %s110, %s111
      %p122 = scmp.eq.s32.totalorder %s18, 0
      %p123 = por %p121, %p122
      %p124 = scmp.ne.s32.totalorder %s110, %s111
      %p125 = scmp.eq.s32.totalorder %s19, 1
      %p126 = por %p124, %p125
      %p128 = scmp.ne.s32.totalorder %s111, %s127
      %p129 = scmp.eq.s32.totalorder %s19, 0
      %p130 = por %p128, %p129
      %s131 = ssub.s32 %s20, %s46
      %s132 = ssub.s32 %s21, %s42
      %s133 = sor.u32 %s131, %s132
      %p134 = scmp.eq.s32.totalorder %s133, 0
      %s136 = sadd.s32 %s135, 1
      %s137 = scalar_select %p134, %s135, %s136
      %p140 = pneg %p134
      %p141 = scmp.eq.s32.totalorder %s13, 1
      %p142 = por %p140, %p141
      %p143 = scmp.ne.s32.totalorder %s135, %s138
      %p144 = scmp.eq.s32.totalorder %s13, 0
      %p145 = por %p143, %p144
      %p146 = scmp.ne.s32.totalorder %s135, %s138
      %p147 = scmp.eq.s32.totalorder %s18, 1
      %p148 = por %p146, %p147
      %p149 = scmp.ne.s32.totalorder %s138, %s139
      %p150 = scmp.eq.s32.totalorder %s18, 0
      %p151 = por %p149, %p150
      %p152 = scmp.ne.s32.totalorder %s138, %s139
      %p153 = scmp.eq.s32.totalorder %s19, 1
      %p154 = por %p152, %p153
      %p156 = scmp.ne.s32.totalorder %s139, %s155
      %p157 = scmp.eq.s32.totalorder %s19, 0
      %p158 = por %p156, %p157
      %p159 = scmp.le.s32.totalorder 1, %s13
      %p160 = scmp.lt.s32.totalorder %s13, 3
      %p161 = pnand %p159, %p160
      %p162 = pneg %p161
      // Predicated region
      $region9: #{_flash_mha_impl.3} parent=5 // pred_check
        _
      $region10: #{_flash_mha_impl.3} parent=5 // pred_check_branch
        %164 = sbr.rel (%p161) target = $region12
      $region11: #{_flash_mha_impl.3} parent=5 // pred_region
        %s165 = ssub.s32 %s13, 1
        // Predicated region
        $region13: #{_flash_mha_impl.3} parent=11 // pred_check
          %p166 = pneg %p97
        $region14: #{_flash_mha_impl.3} parent=11 // pred_check_branch
          %168 = sbr.rel (%p166) target = $region16
        $region15: #{_flash_mha_impl.3} parent=11 // pred_region
          %s169 = smul.u32 4, %s27
          %s171 = ssub.s32 256, 256
          %172 = vsyncadd [#allocation5], %s171
          %s173 = sadd.s32 %s26, %s169
          %s174 = smul.addr %s173, 64
          %s175 = scalar_lea.hbm %s1, %s174
          %s176 = sshll.u32 [#allocation4], 4
          %s177 = int_to_ptr.vmem [resolvable:$true] %s176
          %182 = dma.hbm_to_vmem [thread:$0]  %s175, 256, %s177, [#allocation5], 64, 64, 4
        $region16: #{_flash_mha_impl.3} parent=11 // pred_fallthru
          _
        // Predicated region
        $region17: #{_flash_mha_impl.3} parent=11 // pred_check
          %p183 = pneg %p123
        $region18: #{_flash_mha_impl.3} parent=11 // pred_check_branch
          %185 = sbr.rel (%p183) target = $region20
        $region19: #{_flash_mha_impl.3} parent=11 // pred_region
          %p186 = scmp.lt.s32.totalorder %s26, 0
          %s187 = scalar_select %p186, %s26, 0
          %s188 = scalar_lea.vmem %s2, %s187
        $region20: #{_flash_mha_impl.3} parent=11 // pred_fallthru
          _
      $region12: #{_flash_mha_impl.3} parent=5 // pred_fallthru
        _
      %p189 = scmp.lt.s32.totalorder %s13, 2
      // Predicated region
      $region21: #{_flash_mha_impl.3} parent=5 // pred_check
        %p190 = pneg %p189
      $region22: #{_flash_mha_impl.3} parent=5 // pred_check_branch
        %192 = sbr.rel (%p190) target = $region24
      $region23: #{_flash_mha_impl.3} parent=5 // pred_region
        // Predicated region
        $region25: #{_flash_mha_impl.3} parent=23 // pred_check
          %p193 = pneg %p63
        $region26: #{_flash_mha_impl.3} parent=23 // pred_check_branch
          %195 = sbr.rel (%p193) target = $region28
        $region27: #{_flash_mha_impl.3} parent=23 // pred_region
          %s196 = sand.u32 %s53, 1
          %s197 = scalar_lea.sflag [#allocation3], %s196
          %s198 = sand.u32 %s53, 1
          %s199 = smul.addr %s198, 4
          %s200 = scalar_lea.vmem [#allocation2], %s199
          %s202 = ssub.s32 64, 64
          %203 = vsyncadd %s197, %s202
          %s204 = sadd.s32 %s23, %s21
          %s205 = sadd.s32 %s204, %s20
          %s206 = smul.addr %s205, 64
          %s207 = scalar_lea.hbm %s0, %s206
          %s209 = sshll.u32 %s200, 4
          %s210 = int_to_ptr.vmem [resolvable:$true] %s209
          %212 = dma.hbm_to_vmem [thread:$0]  %s207, 64, %s210, %s197
        $region28: #{_flash_mha_impl.3} parent=23 // pred_fallthru
          _
      $region24: #{_flash_mha_impl.3} parent=5 // pred_fallthru
        _
      %p213 = scmp.le.s32.totalorder 1, %s13
      %p214 = scmp.lt.s32.totalorder %s13, 3
      %p215 = pnand %p213, %p214
      %p216 = pneg %p215
      // Predicated region
      $region29: #{_flash_mha_impl.3} parent=5 // pred_check
        _
      $region30: #{_flash_mha_impl.3} parent=5 // pred_check_branch
        %218 = sbr.rel (%p215) target = $region32
      $region31: #{_flash_mha_impl.3} parent=5 // pred_region
        %s219 = ssub.s32 %s13, 1
        %s220 = sand.u32 %s56, 1
        %s221 = scalar_lea.sflag [#allocation3], %s220
        %s222 = sand.u32 %s56, 1
        %s223 = smul.addr %s222, 4
        %s224 = scalar_lea.vmem [#allocation2], %s223
        // Predicated region
        $region33: #{_flash_mha_impl.3} parent=31 // pred_check
          %p225 = pneg %p69
        $region34: #{_flash_mha_impl.3} parent=31 // pred_check_branch
          %227 = sbr.rel (%p225) target = $region36
        $region35: #{_flash_mha_impl.3} parent=31 // pred_region
          %228 = dma.done %s221, 64
        $region36: #{_flash_mha_impl.3} parent=31 // pred_fallthru
          _
        // Predicated region
        $region37: #{_flash_mha_impl.3} parent=31 // pred_check
          %p229 = pneg %p97
        $region38: #{_flash_mha_impl.3} parent=31 // pred_check_branch
          %231 = sbr.rel (%p229) target = $region40
        $region39: #{_flash_mha_impl.3} parent=31 // pred_region
          %232 = dma.done [#allocation5], 256
        $region40: #{_flash_mha_impl.3} parent=31 // pred_fallthru
          _
        %s233 = sand.u32 %s56, 1
        %s234 = scalar_lea.sflag [#allocation3], %s233
        %s235 = sand.u32 %s56, 1
        %s236 = smul.addr %s235, 4
        %s237 = scalar_lea.vmem [#allocation2], %s236
        %p238 = pneg %p69
        %p239 = pneg %p66
        %p240 = pneg %p97
        %p241 = pneg %p94
        %p242 = scmp.lt.s32.totalorder %s26, 0
        %s243 = scalar_select %p242, %s26, 0
        %s244 = scalar_lea.vmem %s2, %s243
        %p245 = pneg %p123
        %p246 = pneg %p120
        %p247 = pneg %p151
        %p248 = pneg %p148
        %s249 = sand.u32 %s138, 1
        %s250 = sand.u32 %s138, 1
        %s251 = smul.addr %s250, 48
        %s252 = scalar_lea.vmem [#allocation6], %s251
        %s253 = smul.u32 4, %s27
        %p254 = scmp.lt.s32.totalorder %s26, 0
        %s255 = scalar_select %p254, %s26, 0
        %s256 = scalar_lea.vmem %s2, %s255
        %s257 = smul.u32 4, %s24
        %v259 = vld [vmem:[%s224] sm:$0xf]
        %v260 = vld [vmem:[#allocation4] sm:$0xf]
        %v261 = vld [vmem:[#allocation4 + $0x4] sm:$0xf]
        %v262 = vld [vmem:[#allocation4 + $0x8] sm:$0xf]
        %v263 = vld [vmem:[#allocation4 + $0xc] sm:$0xf]
        %v264 = vld [vmem:[%s256] sm:$0x1]
        %v265 = vunpack.c.l.bf16 %v264
        %v266 = vlaneseq
        %v267 = vshrl.u32 %v266, 7
        %v268 = vsub.s32 0, %v267
        %v269 = vrot.slane %v265, %v268
        %v274 = vunpack.c.l.b16 %v260
        %v275 = vunpack.c.l.b16 %v261
        %v276 = vunpack.c.l.b16 %v262
        %v277 = vunpack.c.l.b16 %v263
        %v278 = vpack.c.b16 %v275, %v274
        %v279 = vpack.c.b16 %v277, %v276
        %vm282 = vcmask 261120
        %v284 = vsel %vm282, %v259, 0
        %286 = vmatprep.subr.bf16.mxu0 0
        %287 = vmatpush1.bf16.msra.mxu0 0
        %288 = vmatprep.subr.bf16.mxu0 0
        %289 = vmatpush1.bf16.msra.mxu0 0
        %290 = vmatprep.subr.bf16.mxu0 0
        %291 = vmatpush1.bf16.msra.mxu0 0
        %292 = vmatprep.subr.bf16.mxu0 0
        %293 = vmatpush1.bf16.msra.mxu0 0
        %294 = vmatprep.subr.bf16.mxu0 0
        %295 = vmatpush1.bf16.msra.mxu0 0
        %296 = vmatprep.subr.bf16.mxu0 0
        %297 = vmatpush1.bf16.msra.mxu0 0
        %298 = vmatprep.subr.bf16.mxu0 0
        %299 = vmatpush1.bf16.msra.mxu0 %v279
        %300 = vmatprep.subr.bf16.mxu0 0
        %301 = vmatpush1.bf16.msra.mxu0 %v278
        %302 = vmatprep.subr.bf16.mxu0 0
        %303 = vmatpush2.bf16.msra.mxu0 0
        %304 = vmatprep.subr.bf16.mxu0 0
        %305 = vmatpush2.bf16.msra.mxu0 0
        %306 = vmatprep.subr.bf16.mxu0 0
        %307 = vmatpush2.bf16.msra.mxu0 0
        %308 = vmatprep.subr.bf16.mxu0 0
        %309 = vmatpush2.bf16.msra.mxu0 0
        %310 = vmatprep.subr.bf16.mxu0 0
        %311 = vmatpush2.bf16.msra.mxu0 0
        %312 = vmatprep.subr.bf16.mxu0 0
        %313 = vmatpush2.bf16.msra.mxu0 0
        %314 = vmatprep.subr.bf16.mxu0 0
        %315 = vmatpush2.bf16.msra.mxu0 0
        %316 = vmatprep.subr.bf16.mxu0 0
        %317 = vmatpush2.bf16.msra.mxu0 0
        %318 = vmatprep.mubr.bf16.mxu0 0
        %319 = vmatmul.mubr.bf16.gmra.mxu0 %v284
        %v320 = vpop.f32.mrf.mxu0
        %v321 = vadd.f32 %v269, %v320
        %v322 = vpop.f32.mrf.mxu0
        %v323 = vpop.f32.mrf.mxu0
        %v324 = vpop.f32.mrf.mxu0
        %325 = vdwg.mxu0
        %v326 = vpack.c.bf16 %v321, %v321
        %vm327 = vcmask 60416
        %328 = vst.msk [vmem:[%s252] sm:$0xf] %vm327, %v326
        %v330 = vunpack.c.l.b16 %v326
        %v331 = vpack.c.b16 %v330, %v330
        %332 = vrot.lane.b32.xlu0 %v331, 120
        %v333 = vpop.permute.xlu0 %332
        %s335 = scalar_lea.vmem %s252, 4 [#allocation6]
        %336 = vst.msk [vmem:[%s335] sm:$0xf] %vm327, %v333
        %337 = vrot.lane.b32.xlu0 %v331, 112
        %v338 = vpop.permute.xlu0 %337
        %s340 = scalar_lea.vmem %s252, 8 [#allocation6]
        %341 = vst.msk [vmem:[%s340] sm:$0xf] %vm327, %v338
        %342 = vrot.lane.b32.xlu0 %v331, 104
        %v343 = vpop.permute.xlu0 %342
        %s345 = scalar_lea.vmem %s252, 12 [#allocation6]
        %346 = vst.msk [vmem:[%s345] sm:$0xf] %vm327, %v343
        %347 = vrot.lane.b32.xlu0 %v331, 96
        %v348 = vpop.permute.xlu0 %347
        %s350 = scalar_lea.vmem %s252, 16 [#allocation6]
        %351 = vst.msk [vmem:[%s350] sm:$0xf] %vm327, %v348
        %352 = vrot.lane.b32.xlu0 %v331, 88
        %v353 = vpop.permute.xlu0 %352
        %s355 = scalar_lea.vmem %s252, 20 [#allocation6]
        %356 = vst.msk [vmem:[%s355] sm:$0xf] %vm327, %v353
        %357 = vrot.lane.b32.xlu0 %v331, 80
        %v358 = vpop.permute.xlu0 %357
        %s360 = scalar_lea.vmem %s252, 24 [#allocation6]
        %361 = vst.msk [vmem:[%s360] sm:$0xf] %vm327, %v358
        %362 = vrot.lane.b32.xlu0 %v331, 72
        %v363 = vpop.permute.xlu0 %362
        %s365 = scalar_lea.vmem %s252, 28 [#allocation6]
        %366 = vst.msk [vmem:[%s365] sm:$0xf] %vm327, %v363
        %367 = vrot.lane.b32.xlu0 %v331, 64
        %v368 = vpop.permute.xlu0 %367
        %s370 = scalar_lea.vmem %s252, 32 [#allocation6]
        %371 = vst.msk [vmem:[%s370] sm:$0xf] %vm327, %v368
        %372 = vrot.lane.b32.xlu0 %v331, 56
        %v373 = vpop.permute.xlu0 %372
        %s375 = scalar_lea.vmem %s252, 36 [#allocation6]
        %376 = vst.msk [vmem:[%s375] sm:$0xf] %vm327, %v373
        %377 = vrot.lane.b32.xlu0 %v331, 48
        %v378 = vpop.permute.xlu0 %377
        %s380 = scalar_lea.vmem %s252, 40 [#allocation6]
        %381 = vst.msk [vmem:[%s380] sm:$0xf] %vm327, %v378
        %382 = vrot.lane.b32.xlu0 %v331, 40
        %v383 = vpop.permute.xlu0 %382
        %s385 = scalar_lea.vmem %s252, 44 [#allocation6]
        %386 = vst.msk [vmem:[%s385] sm:$0xf] %vm327, %v383
        %s387 = sand.u32 %s138, 1
        %s388 = sand.u32 %s138, 1
        %s389 = smul.addr %s388, 48
        %s390 = scalar_lea.vmem [#allocation6], %s389
        // Predicated region
        $region41: #{_flash_mha_impl.3} parent=31 // pred_check
          %p391 = pneg %p148
        $region42: #{_flash_mha_impl.3} parent=31 // pred_check_branch
          %393 = sbr.rel (%p391) target = $region44
        $region43: #{_flash_mha_impl.3} parent=31 // pred_region
          %s394 = smul.u32 4, %s24
          %s395 = sadd.s32 %s25, %s394
          %s396 = smul.addr %s395, 4
          %s397 = scalar_lea.vmem %s3, %s396
          // Predicated region
          $region45: #{_flash_mha_impl.3} parent=43 // pred_check
            _
          $region46: #{_flash_mha_impl.3} parent=43 // pred_check_branch
            %399 = sbr.rel (0) target = $region48
          $region47: #{_flash_mha_impl.3} parent=43 // pred_region
            // Predicated region
            $region49: #{_flash_mha_impl.3} parent=47 // pred_check
              _
            $region50: #{_flash_mha_impl.3} parent=47 // pred_check_branch
              %401 = sbr.rel target = $region52
            $region51: #{_flash_mha_impl.3} parent=47 // pred_region
              // Predicated region
              $region64: #{_flash_mha_impl.3} parent=51 // pred_check
                _
              $region65: #{_flash_mha_impl.3} parent=51 // pred_check_branch
                %439 = sbr.rel (0) target = $region67
              $region66: #{_flash_mha_impl.3} parent=51 // pred_region
                loop: start=0, step=1, limit=1
                $region68: #{_flash_mha_impl.3} parent=66 // loop_pre_header
                  _
                $region69: #{_flash_mha_impl.3} parent=66 // loop_header
                  %s441 = sphi 0, %s445
                  %p442 = scmp.ge.s32.totalorder %s441, 1
                  %s446 = sphi %s390, %s390
                  %s447 = sphi %s397, %s397
                $region70: #{_flash_mha_impl.3} parent=66 // loop_header_branch
                  %444 = sbr.rel (%p442) target = $region74
                $region71: #{_flash_mha_impl.3} parent=66 // loop_body
                  _
                $region72: #{_flash_mha_impl.3} parent=66 // loop_footer
                  %s445 = sadd.s32 1, %s441
                $region73: #{_flash_mha_impl.3} parent=66 // loop_footer_branch
                  %440 = sbr.rel target = $region69
                $region74: #{_flash_mha_impl.3} parent=66 // loop_exit
                  _
                %s449 = ssub.s32 16, 1
                loop: start=0, step=1, limit=1
                $region75: #{_flash_mha_impl.3} parent=66 // loop_pre_header
                  _
                $region76: #{_flash_mha_impl.3} parent=66 // loop_header
                  %s451 = sphi 0, %s455
                  %p452 = scmp.ge.s32.totalorder %s451, 1
                  %s456 = sphi %s390, %s390
                  %s457 = sphi %s397, %s397
                $region77: #{_flash_mha_impl.3} parent=66 // loop_header_branch
                  %454 = sbr.rel (%p452) target = $region81
                $region78: #{_flash_mha_impl.3} parent=66 // loop_body
                  %v458 = vld [vmem:[%s456] sm:%s449]
                  %459 = vst [vmem:[%s457] sm:%s449] %v458
                  %v460 = vld [vmem:[%s456 + $0x4] sm:%s449]
                  %461 = vst [vmem:[%s457 + $0x4] sm:%s449] %v460
                  %v462 = vld [vmem:[%s456 + $0x8] sm:%s449]
                  %463 = vst [vmem:[%s457 + $0x8] sm:%s449] %v462
                  %v464 = vld [vmem:[%s456 + $0xc] sm:%s449]
                  %465 = vst [vmem:[%s457 + $0xc] sm:%s449] %v464
                  %v466 = vld [vmem:[%s456 + $0x10] sm:%s449]
                  %467 = vst [vmem:[%s457 + $0x20] sm:%s449] %v466
                  %v468 = vld [vmem:[%s456 + $0x14] sm:%s449]
                  %469 = vst [vmem:[%s457 + $0x24] sm:%s449] %v468
                  %v470 = vld [vmem:[%s456 + $0x18] sm:%s449]
                  %471 = vst [vmem:[%s457 + $0x28] sm:%s449] %v470
                  %v472 = vld [vmem:[%s456 + $0x1c] sm:%s449]
                  %473 = vst [vmem:[%s457 + $0x2c] sm:%s449] %v472
                  %v474 = vld [vmem:[%s456 + $0x20] sm:%s449]
                  %475 = vst [vmem:[%s457 + $0x40] sm:%s449] %v474
                  %v476 = vld [vmem:[%s456 + $0x24] sm:%s449]
                  %477 = vst [vmem:[%s457 + $0x44] sm:%s449] %v476
                  %v478 = vld [vmem:[%s456 + $0x28] sm:%s449]
                  %479 = vst [vmem:[%s457 + $0x48] sm:%s449] %v478
                  %v480 = vld [vmem:[%s456 + $0x2c] sm:%s449]
                  %481 = vst [vmem:[%s457 + $0x4c] sm:%s449] %v480
                $region79: #{_flash_mha_impl.3} parent=66 // loop_footer
                  %s455 = sadd.s32 1, %s451
                $region80: #{_flash_mha_impl.3} parent=66 // loop_footer_branch
                  %450 = sbr.rel target = $region76
                $region81: #{_flash_mha_impl.3} parent=66 // loop_exit
                  _
              $region67: #{_flash_mha_impl.3} parent=51 // pred_fallthru
                _
            $region52: #{_flash_mha_impl.3} parent=47 // pred_fallthru
              _
            // Predicated region
            $region53: #{_flash_mha_impl.3} parent=47 // pred_check
              _
            $region54: #{_flash_mha_impl.3} parent=47 // pred_check_branch
              %403 = sbr.rel (0) target = $region56
            $region55: #{_flash_mha_impl.3} parent=47 // pred_region
              %s405 = ssub.s32 16, 1
              loop: start=0, step=1, limit=1
              $region57: #{_flash_mha_impl.3} parent=55 // loop_pre_header
                _
              $region58: #{_flash_mha_impl.3} parent=55 // loop_header
                %s407 = sphi 0, %s411
                %p408 = scmp.ge.s32.totalorder %s407, 1
                %s412 = sphi %s390, %s390
                %s413 = sphi %s397, %s397
              $region59: #{_flash_mha_impl.3} parent=55 // loop_header_branch
                %410 = sbr.rel (%p408) target = $region63
              $region60: #{_flash_mha_impl.3} parent=55 // loop_body
                %v414 = vld [vmem:[%s412] sm:%s405]
                %415 = vst [vmem:[%s413] sm:%s405] %v414
                %v416 = vld [vmem:[%s412 + $0x4] sm:%s405]
                %417 = vst [vmem:[%s413 + $0x4] sm:%s405] %v416
                %v418 = vld [vmem:[%s412 + $0x8] sm:%s405]
                %419 = vst [vmem:[%s413 + $0x8] sm:%s405] %v418
                %v420 = vld [vmem:[%s412 + $0xc] sm:%s405]
                %421 = vst [vmem:[%s413 + $0xc] sm:%s405] %v420
                %v422 = vld [vmem:[%s412 + $0x10] sm:%s405]
                %423 = vst [vmem:[%s413 + $0x20] sm:%s405] %v422
                %v424 = vld [vmem:[%s412 + $0x14] sm:%s405]
                %425 = vst [vmem:[%s413 + $0x24] sm:%s405] %v424
                %v426 = vld [vmem:[%s412 + $0x18] sm:%s405]
                %427 = vst [vmem:[%s413 + $0x28] sm:%s405] %v426
                %v428 = vld [vmem:[%s412 + $0x1c] sm:%s405]
                %429 = vst [vmem:[%s413 + $0x2c] sm:%s405] %v428
                %v430 = vld [vmem:[%s412 + $0x20] sm:%s405]
                %431 = vst [vmem:[%s413 + $0x40] sm:%s405] %v430
                %v432 = vld [vmem:[%s412 + $0x24] sm:%s405]
                %433 = vst [vmem:[%s413 + $0x44] sm:%s405] %v432
                %v434 = vld [vmem:[%s412 + $0x28] sm:%s405]
                %435 = vst [vmem:[%s413 + $0x48] sm:%s405] %v434
                %v436 = vld [vmem:[%s412 + $0x2c] sm:%s405]
                %437 = vst [vmem:[%s413 + $0x4c] sm:%s405] %v436
              $region61: #{_flash_mha_impl.3} parent=55 // loop_footer
                %s411 = sadd.s32 1, %s407
              $region62: #{_flash_mha_impl.3} parent=55 // loop_footer_branch
                %406 = sbr.rel target = $region58
              $region63: #{_flash_mha_impl.3} parent=55 // loop_exit
                _
            $region56: #{_flash_mha_impl.3} parent=47 // pred_fallthru
              _
          $region48: #{_flash_mha_impl.3} parent=43 // pred_fallthru
            _
          %482 = vnop
        $region44: #{_flash_mha_impl.3} parent=31 // pred_fallthru
          _
      $region32: #{_flash_mha_impl.3} parent=5 // pred_fallthru
        _
      %p483 = scmp.le.s32.totalorder 2, %s13
      // Predicated region
      $region82: #{_flash_mha_impl.3} parent=5 // pred_check
        %p484 = pneg %p483
      $region83: #{_flash_mha_impl.3} parent=5 // pred_check_branch
        %486 = sbr.rel (%p484) target = $region85
      $region84: #{_flash_mha_impl.3} parent=5 // pred_region
        %s487 = ssub.s32 %s13, 2
        // Predicated region
        $region86: #{_flash_mha_impl.3} parent=84 // pred_check
          %p488 = pneg %p154
        $region87: #{_flash_mha_impl.3} parent=84 // pred_check_branch
          %490 = sbr.rel (%p488) target = $region89
        $region88: #{_flash_mha_impl.3} parent=84 // pred_region
          %s491 = sand.u32 %s139, 1
          %s492 = sand.u32 %s139, 1
          %s493 = smul.addr %s492, 48
          %s494 = scalar_lea.vmem [#allocation6], %s493
        $region89: #{_flash_mha_impl.3} parent=84 // pred_fallthru
          _
      $region85: #{_flash_mha_impl.3} parent=5 // pred_fallthru
        _
    $region6: #{_flash_mha_impl.3} parent=1 // loop_footer
      %s17 = sadd.s32 1, %s13
    $region7: #{_flash_mha_impl.3} parent=1 // loop_footer_branch
      %12 = sbr.rel target = $region3
    $region8: #{_flash_mha_impl.3} parent=1 // loop_exit
      _
    %495 = vsyncpa [#allocation3], 1
    %s496 = scalar_lea.sflag [#allocation3], 1
    %497 = vsyncpa %s496, 1
    %498 = vsyncpa [#allocation5], 1

// kernel: _flash_mha_impl.4
$region0: #{_flash_mha_impl.4}
  #allocation0 [shape = 'u32[]', space=smem, size = 0x4, offset = 0x4, fixed_abs, tag = 'smem constant byte address 0x4 - core index']
  #allocation1 [shape = 'u32[144,128]{1,0:T(1,128)}', space=vmem, size = 0x12000, scoped, tag = 'internal scratch']
  #allocation2 [shape = 'f32[4,8,1]{2,1,0:T(8,128)}', space=vmem, size = 0x4000, scoped, tag = 'scratch operand']
  #allocation3 [shape = 'f32[4,8,1]{2,1,0:T(8,128)}', space=vmem, size = 0x4000, scoped, tag = 'scratch operand']
  #allocation4 [shape = 'f32[4,8,8]{2,1,0:T(8,128)}', space=vmem, size = 0x4000, scoped, tag = 'scratch operand']
  %s0 = inlined_call_operand.vmem [shape: bf16[3,8,8,8], index: 0, kind: input, shape index: {}, may-alias: {0,1,2}]
  %s1 = inlined_call_operand.vmem [shape: bf16[3,8,8,8], index: 1, kind: input, shape index: {}, may-alias: {0,1,2}]
  %s2 = inlined_call_operand.vmem [shape: bf16[3,8,8,8], index: 2, kind: input, shape index: {}, may-alias: {0,1,2}]
  %s3 = inlined_call_operand.vmem [shape: bf16[8,8,8], index: 3, kind: output, shape index: {}]
  %s4 = sld [smem:[#allocation0]]
  $region53: #{_flash_mha_impl.4} parent=0
    _
  %s6 = ssub.s32 1, %s4
  %s7 = scalar_select 0, %s6, %s4
  loop: start=0, step=1, limit=4
  $region2: #{_flash_mha_impl.4} parent=0 // loop_pre_header
    _
  $region3: #{_flash_mha_impl.4} parent=0 // loop_header
    %s9 = sphi 0, %s13
    %p10 = scmp.ge.s32.totalorder %s9, 4
    %s16 = sphi 0, %s35
    %s17 = sphi 0, %s31
    %s18 = sphi 0, %s27
    %s19 = sphi 0, %s16
    %s20 = sphi 0, %s17
    %s21 = sphi 0, %s18
    %s22 = sphi 0, %s19
    %s23 = sphi 0, %s20
    %s24 = sphi 0, %s21
    %s40 = sphi 0, %s42
    %s43 = sphi 0, %s40
    %s44 = sphi 0, %s43
    %s60 = sphi 0, %s44
    %s68 = sphi 0, %s70
    %s71 = sphi 0, %s68
    %s72 = sphi 0, %s71
    %s88 = sphi 0, %s72
    %s96 = sphi 0, %s98
    %s99 = sphi 0, %s96
    %s100 = sphi 0, %s99
    %s116 = sphi 0, %s100
    %s124 = sphi 0, %s126
    %s127 = sphi 0, %s124
    %s128 = sphi 0, %s127
    %s144 = sphi 0, %s128
  $region4: #{_flash_mha_impl.4} parent=0 // loop_header_branch
    %12 = sbr.rel (%p10) target = $region8
  $region5: #{_flash_mha_impl.4} parent=0 // loop_body
    %s14 = ssub.s32 %s9, 1
    %s15 = ssub.s32 %s9, 2
    %s25 = sadd.s32 1, %s18
    %p26 = scmp.ge.s32.totalorder %s25, 1
    %s27 = scalar_select %p26, 0, %s25
    %s28 = sadd.s32 1, %s17
    %s29 = scalar_select %p26, %s28, %s17
    %p30 = scmp.ge.s32.totalorder %s29, 1
    %s31 = scalar_select %p30, 0, %s29
    %s32 = sadd.s32 1, %s16
    %s33 = scalar_select %p30, %s32, %s16
    %p34 = scmp.ge.s32.totalorder %s33, 2
    %s35 = scalar_select %p34, 0, %s33
    %s36 = ssub.s32 %s16, %s35
    %s37 = ssub.s32 %s17, %s31
    %s38 = sor.u32 %s36, %s37
    %p39 = scmp.eq.s32.totalorder %s38, 0
    %s41 = sadd.s32 %s40, 1
    %s42 = scalar_select %p39, %s40, %s41
    %p45 = pneg %p39
    %p46 = scmp.eq.s32.totalorder %s9, 1
    %p47 = por %p45, %p46
    %p48 = scmp.ne.s32.totalorder %s40, %s43
    %p49 = scmp.eq.s32.totalorder %s9, 0
    %p50 = por %p48, %p49
    %p51 = scmp.ne.s32.totalorder %s40, %s43
    %p52 = scmp.eq.s32.totalorder %s14, 1
    %p53 = por %p51, %p52
    %p54 = scmp.ne.s32.totalorder %s43, %s44
    %p55 = scmp.eq.s32.totalorder %s14, 0
    %p56 = por %p54, %p55
    %p57 = scmp.ne.s32.totalorder %s43, %s44
    %p58 = scmp.eq.s32.totalorder %s15, 1
    %p59 = por %p57, %p58
    %p61 = scmp.ne.s32.totalorder %s44, %s60
    %p62 = scmp.eq.s32.totalorder %s15, 0
    %p63 = por %p61, %p62
    %s64 = ssub.s32 %s16, %s35
    %s65 = ssub.s32 %s18, %s27
    %s66 = sor.u32 %s64, %s65
    %p67 = scmp.eq.s32.totalorder %s66, 0
    %s69 = sadd.s32 %s68, 1
    %s70 = scalar_select %p67, %s68, %s69
    %p73 = pneg %p67
    %p74 = scmp.eq.s32.totalorder %s9, 1
    %p75 = por %p73, %p74
    %p76 = scmp.ne.s32.totalorder %s68, %s71
    %p77 = scmp.eq.s32.totalorder %s9, 0
    %p78 = por %p76, %p77
    %p79 = scmp.ne.s32.totalorder %s68, %s71
    %p80 = scmp.eq.s32.totalorder %s14, 1
    %p81 = por %p79, %p80
    %p82 = scmp.ne.s32.totalorder %s71, %s72
    %p83 = scmp.eq.s32.totalorder %s14, 0
    %p84 = por %p82, %p83
    %p85 = scmp.ne.s32.totalorder %s71, %s72
    %p86 = scmp.eq.s32.totalorder %s15, 1
    %p87 = por %p85, %p86
    %p89 = scmp.ne.s32.totalorder %s72, %s88
    %p90 = scmp.eq.s32.totalorder %s15, 0
    %p91 = por %p89, %p90
    %s92 = ssub.s32 %s16, %s35
    %s93 = ssub.s32 %s18, %s27
    %s94 = sor.u32 %s92, %s93
    %p95 = scmp.eq.s32.totalorder %s94, 0
    %s97 = sadd.s32 %s96, 1
    %s98 = scalar_select %p95, %s96, %s97
    %p101 = pneg %p95
    %p102 = scmp.eq.s32.totalorder %s9, 1
    %p103 = por %p101, %p102
    %p104 = scmp.ne.s32.totalorder %s96, %s99
    %p105 = scmp.eq.s32.totalorder %s9, 0
    %p106 = por %p104, %p105
    %p107 = scmp.ne.s32.totalorder %s96, %s99
    %p108 = scmp.eq.s32.totalorder %s14, 1
    %p109 = por %p107, %p108
    %p110 = scmp.ne.s32.totalorder %s99, %s100
    %p111 = scmp.eq.s32.totalorder %s14, 0
    %p112 = por %p110, %p111
    %p113 = scmp.ne.s32.totalorder %s99, %s100
    %p114 = scmp.eq.s32.totalorder %s15, 1
    %p115 = por %p113, %p114
    %p117 = scmp.ne.s32.totalorder %s100, %s116
    %p118 = scmp.eq.s32.totalorder %s15, 0
    %p119 = por %p117, %p118
    %s120 = ssub.s32 %s16, %s35
    %s121 = ssub.s32 %s17, %s31
    %s122 = sor.u32 %s120, %s121
    %p123 = scmp.eq.s32.totalorder %s122, 0
    %s125 = sadd.s32 %s124, 1
    %s126 = scalar_select %p123, %s124, %s125
    %p129 = pneg %p123
    %p130 = scmp.eq.s32.totalorder %s9, 1
    %p131 = por %p129, %p130
    %p132 = scmp.ne.s32.totalorder %s124, %s127
    %p133 = scmp.eq.s32.totalorder %s9, 0
    %p134 = por %p132, %p133
    %p135 = scmp.ne.s32.totalorder %s124, %s127
    %p136 = scmp.eq.s32.totalorder %s14, 1
    %p137 = por %p135, %p136
    %p138 = scmp.ne.s32.totalorder %s127, %s128
    %p139 = scmp.eq.s32.totalorder %s14, 0
    %p140 = por %p138, %p139
    %p141 = scmp.ne.s32.totalorder %s127, %s128
    %p142 = scmp.eq.s32.totalorder %s15, 1
    %p143 = por %p141, %p142
    %p145 = scmp.ne.s32.totalorder %s128, %s144
    %p146 = scmp.eq.s32.totalorder %s15, 0
    %p147 = por %p145, %p146
    %p148 = scmp.le.s32.totalorder 1, %s9
    %p149 = scmp.lt.s32.totalorder %s9, 3
    %p150 = pnand %p148, %p149
    %p151 = pneg %p150
    // Predicated region
    $region9: #{_flash_mha_impl.4} parent=5 // pred_check
      _
    $region10: #{_flash_mha_impl.4} parent=5 // pred_check_branch
      %153 = sbr.rel (%p150) target = $region12
    $region11: #{_flash_mha_impl.4} parent=5 // pred_region
      %s154 = ssub.s32 %s9, 1
    $region12: #{_flash_mha_impl.4} parent=5 // pred_fallthru
      _
    %p155 = scmp.lt.s32.totalorder %s9, 2
    // Predicated region
    $region13: #{_flash_mha_impl.4} parent=5 // pred_check
      %p156 = pneg %p155
    $region14: #{_flash_mha_impl.4} parent=5 // pred_check_branch
      %158 = sbr.rel (%p156) target = $region16
    $region15: #{_flash_mha_impl.4} parent=5 // pred_region
      // Predicated region
      $region17: #{_flash_mha_impl.4} parent=15 // pred_check
        %p159 = pneg %p50
      $region18: #{_flash_mha_impl.4} parent=15 // pred_check_branch
        %161 = sbr.rel (%p159) target = $region20
      $region19: #{_flash_mha_impl.4} parent=15 // pred_region
        %s162 = smul.u32 4, %s16
        %p163 = scmp.lt.s32.totalorder %s162, 7
        %s164 = scalar_select %p163, %s162, 7
        %p165 = scmp.lt.s32.totalorder %s17, 0
        %s166 = scalar_select %p165, %s17, 0
        %s167 = sadd.s32 %s166, %s164
        %s168 = smul.addr %s167, 4
        %s169 = scalar_lea.vmem %s0, %s168
        %s170 = smul.u32 4, %s16
      $region20: #{_flash_mha_impl.4} parent=15 // pred_fallthru
        _
      // Predicated region
      $region21: #{_flash_mha_impl.4} parent=15 // pred_check
        %p171 = pneg %p78
      $region22: #{_flash_mha_impl.4} parent=15 // pred_check_branch
        %173 = sbr.rel (%p171) target = $region24
      $region23: #{_flash_mha_impl.4} parent=15 // pred_region
        %s174 = smul.u32 4, %s16
        %p175 = scmp.lt.s32.totalorder %s174, 7
        %s176 = scalar_select %p175, %s174, 7
        %p177 = scmp.lt.s32.totalorder %s18, 0
        %s178 = scalar_select %p177, %s18, 0
        %s179 = sadd.s32 %s178, %s176
        %s180 = sadd.s32 %s179, 8
        %s181 = smul.addr %s180, 4
        %s182 = scalar_lea.vmem %s1, %s181
        %s183 = smul.u32 4, %s16
      $region24: #{_flash_mha_impl.4} parent=15 // pred_fallthru
        _
      // Predicated region
      $region25: #{_flash_mha_impl.4} parent=15 // pred_check
        %p184 = pneg %p106
      $region26: #{_flash_mha_impl.4} parent=15 // pred_check_branch
        %186 = sbr.rel (%p184) target = $region28
      $region27: #{_flash_mha_impl.4} parent=15 // pred_region
        %s187 = smul.u32 4, %s16
        %p188 = scmp.lt.s32.totalorder %s187, 7
        %s189 = scalar_select %p188, %s187, 7
        %p190 = scmp.lt.s32.totalorder %s18, 0
        %s191 = scalar_select %p190, %s18, 0
        %s192 = sadd.s32 %s191, %s189
        %s193 = sadd.s32 %s192, 16
        %s194 = smul.addr %s193, 4
        %s195 = scalar_lea.vmem %s2, %s194
        %s196 = smul.u32 4, %s16
      $region28: #{_flash_mha_impl.4} parent=15 // pred_fallthru
        _
    $region16: #{_flash_mha_impl.4} parent=5 // pred_fallthru
      _
    %p197 = scmp.le.s32.totalorder 1, %s9
    %p198 = scmp.lt.s32.totalorder %s9, 3
    %p199 = pnand %p197, %p198
    %p200 = pneg %p199
    // Predicated region
    $region29: #{_flash_mha_impl.4} parent=5 // pred_check
      _
    $region30: #{_flash_mha_impl.4} parent=5 // pred_check_branch
      %202 = sbr.rel (%p199) target = $region32
    $region31: #{_flash_mha_impl.4} parent=5 // pred_region
      %s203 = ssub.s32 %s9, 1
      %s204 = smul.u32 4, %s19
      %p205 = scmp.lt.s32.totalorder %s204, 7
      %s206 = scalar_select %p205, %s204, 7
      %p207 = scmp.lt.s32.totalorder %s20, 0
      %s208 = scalar_select %p207, %s20, 0
      %s209 = sadd.s32 %s208, %s206
      %s210 = smul.addr %s209, 4
      %s211 = scalar_lea.vmem %s0, %s210
      %p212 = pneg %p56
      %p213 = pneg %p53
      %s214 = smul.u32 4, %s19
      %p215 = scmp.lt.s32.totalorder %s214, 7
      %s216 = scalar_select %p215, %s214, 7
      %p217 = scmp.lt.s32.totalorder %s21, 0
      %s218 = scalar_select %p217, %s21, 0
      %s219 = sadd.s32 %s218, %s216
      %s220 = sadd.s32 %s219, 8
      %s221 = smul.addr %s220, 4
      %s222 = scalar_lea.vmem %s1, %s221
      %p223 = pneg %p84
      %p224 = pneg %p81
      %s225 = smul.u32 4, %s19
      %p226 = scmp.lt.s32.totalorder %s225, 7
      %s227 = scalar_select %p226, %s225, 7
      %p228 = scmp.lt.s32.totalorder %s21, 0
      %s229 = scalar_select %p228, %s21, 0
      %s230 = sadd.s32 %s229, %s227
      %s231 = sadd.s32 %s230, 16
      %s232 = smul.addr %s231, 4
      %s233 = scalar_lea.vmem %s2, %s232
      %p234 = pneg %p112
      %p235 = pneg %p109
      %p236 = pneg %p140
      %p237 = pneg %p137
      %s238 = smul.u32 4, %s19
      %p239 = scmp.lt.s32.totalorder %s238, 7
      %s240 = scalar_select %p239, %s238, 7
      %p241 = scmp.lt.s32.totalorder %s20, 0
      %s242 = scalar_select %p241, %s20, 0
      %s243 = sadd.s32 %s242, %s240
      %s244 = smul.addr %s243, 4
      %s245 = scalar_lea.vmem %s3, %s244
      %s246 = smul.u32 4, %s19
      %p247 = scmp.lt.s32.totalorder %s246, 7
      %s248 = scalar_select %p247, %s246, 7
      %p249 = scmp.lt.s32.totalorder %s20, 0
      %s250 = scalar_select %p249, %s20, 0
      %s251 = sadd.s32 %s250, %s248
      %s252 = smul.addr %s251, 4
      %s253 = scalar_lea.vmem %s0, %s252
      %s254 = smul.u32 4, %s19
      %s255 = smul.u32 4, %s19
      %p256 = scmp.lt.s32.totalorder %s255, 7
      %s257 = scalar_select %p256, %s255, 7
      %p258 = scmp.lt.s32.totalorder %s21, 0
      %s259 = scalar_select %p258, %s21, 0
      %s260 = sadd.s32 %s259, %s257
      %s261 = sadd.s32 %s260, 8
      %s262 = smul.addr %s261, 4
      %s263 = scalar_lea.vmem %s1, %s262
      %s264 = smul.u32 4, %s19
      %s265 = smul.u32 4, %s19
      %p266 = scmp.lt.s32.totalorder %s265, 7
      %s267 = scalar_select %p266, %s265, 7
      %p268 = scmp.lt.s32.totalorder %s21, 0
      %s269 = scalar_select %p268, %s21, 0
      %s270 = sadd.s32 %s269, %s267
      %s271 = sadd.s32 %s270, 16
      %s272 = smul.addr %s271, 4
      %s273 = scalar_lea.vmem %s2, %s272
      %s274 = smul.u32 4, %s19
      %s275 = smul.u32 4, %s19
      %p276 = scmp.lt.s32.totalorder %s275, 7
      %s277 = scalar_select %p276, %s275, 7
      %p278 = scmp.lt.s32.totalorder %s20, 0
      %s279 = scalar_select %p278, %s20, 0
      %s280 = sadd.s32 %s279, %s277
      %s281 = smul.addr %s280, 4
      %s282 = scalar_lea.vmem %s3, %s281
      %s283 = smul.u32 4, %s19
      %p285 = scmp.eq.s32.totalorder %s21, 0
      // Predicated region
      $region33: #{_flash_mha_impl.4} parent=31 // pred_check
        %p286 = pneg %p285
      $region34: #{_flash_mha_impl.4} parent=31 // pred_check_branch
        %288 = sbr.rel (%p286) target = $region36
      $region35: #{_flash_mha_impl.4} parent=31 // pred_region
        %vm289 = vcmask 7168
        %290 = vst.msk [vmem:[#allocation2] sm:$0xff] %vm289, -inf
        %291 = vst.msk [vmem:[#allocation2 + $0x8] sm:$0xff] %vm289, -inf
        %292 = vst.msk [vmem:[#allocation2 + $0x10] sm:$0xff] %vm289, -inf
        %293 = vst.msk [vmem:[#allocation2 + $0x18] sm:$0xff] %vm289, -inf
        %294 = vst.msk [vmem:[#allocation3] sm:$0xff] %vm289, 0.0
        %295 = vst.msk [vmem:[#allocation3 + $0x8] sm:$0xff] %vm289, 0.0
        %296 = vst.msk [vmem:[#allocation3 + $0x10] sm:$0xff] %vm289, 0.0
        %297 = vst.msk [vmem:[#allocation3 + $0x18] sm:$0xff] %vm289, 0.0
        %vm298 = vcmask 64512
        %299 = vst.msk [vmem:[#allocation4] sm:$0xff] %vm298, 0.0
        %300 = vst.msk [vmem:[#allocation4 + $0x8] sm:$0xff] %vm298, 0.0
        %301 = vst.msk [vmem:[#allocation4 + $0x10] sm:$0xff] %vm298, 0.0
        %302 = vst.msk [vmem:[#allocation4 + $0x18] sm:$0xff] %vm298, 0.0
      $region36: #{_flash_mha_impl.4} parent=31 // pred_fallthru
        _
      %v303 = vld [vmem:[%s253] sm:$0xf]
      %v304 = vld [vmem:[%s253 + $0x4] sm:$0xf]
      %v305 = vld [vmem:[%s253 + $0x8] sm:$0xf]
      %v306 = vld [vmem:[%s253 + $0xc] sm:$0xf]
      %v307 = vld [vmem:[%s263] sm:$0xf]
      %v308 = vld [vmem:[%s263 + $0x4] sm:$0xf]
      %v309 = vld [vmem:[%s263 + $0x8] sm:$0xf]
      %v310 = vld [vmem:[%s263 + $0xc] sm:$0xf]
      %v311 = vld [vmem:[%s273] sm:$0xf]
      %v312 = vld [vmem:[%s273 + $0x4] sm:$0xf]
      %v313 = vld [vmem:[%s273 + $0x8] sm:$0xf]
      %v314 = vld [vmem:[%s273 + $0xc] sm:$0xf]
      %vm315 = vcmask 64512
      %v317 = vsel %vm315, %v303, 0
      %v320 = vsel %vm315, %v307, 0
      %322 = vmatprep.subr.bf16.mxu0 0
      %323 = vmatpush1.bf16.xpose.msra.mxu0 0
      %324 = vmatprep.subr.bf16.mxu0 0
      %325 = vmatpush1.bf16.xpose.msra.mxu0 0
      %326 = vmatprep.subr.bf16.mxu0 0
      %327 = vmatpush1.bf16.xpose.msra.mxu0 0
      %328 = vmatprep.subr.bf16.mxu0 0
      %329 = vmatpush1.bf16.xpose.msra.mxu0 0
      %330 = vmatprep.subr.bf16.mxu0 0
      %331 = vmatpush1.bf16.xpose.msra.mxu0 0
      %332 = vmatprep.subr.bf16.mxu0 0
      %333 = vmatpush1.bf16.xpose.msra.mxu0 0
      %334 = vmatprep.subr.bf16.mxu0 0
      %335 = vmatpush1.bf16.xpose.msra.mxu0 0
      %336 = vmatprep.subr.bf16.mxu0 0
      %337 = vmatpush1.bf16.xpose.msra.mxu0 %v320
      %338 = vmatprep.subr.bf16.mxu0 0
      %339 = vmatpush2.bf16.xpose.msra.mxu0 0
      %340 = vmatprep.subr.bf16.mxu0 0
      %341 = vmatpush2.bf16.xpose.msra.mxu0 0
      %342 = vmatprep.subr.bf16.mxu0 0
      %343 = vmatpush2.bf16.xpose.msra.mxu0 0
      %344 = vmatprep.subr.bf16.mxu0 0
      %345 = vmatpush2.bf16.xpose.msra.mxu0 0
      %346 = vmatprep.subr.bf16.mxu0 0
      %347 = vmatpush2.bf16.xpose.msra.mxu0 0
      %348 = vmatprep.subr.bf16.mxu0 0
      %349 = vmatpush2.bf16.xpose.msra.mxu0 0
      %350 = vmatprep.subr.bf16.mxu0 0
      %351 = vmatpush2.bf16.xpose.msra.mxu0 0
      %352 = vmatprep.subr.bf16.mxu0 0
      %353 = vmatpush2.bf16.xpose.msra.mxu0 0
      %354 = vmatprep.mubr.bf16.mxu0 0
      %355 = vmatmul.mubr.bf16.gmra.mxu0 %v317
      %v356 = vpop.f32.mrf.mxu0
      %v357 = vadd.f32 0.0, %v356
      %v358 = vpop.f32.mrf.mxu0
      %v359 = vpop.f32.mrf.mxu0
      %v360 = vpop.f32.mrf.mxu0
      %361 = vdwg.mxu0
      %v363 = vsel %vm315, %v304, 0
      %v366 = vsel %vm315, %v308, 0
      %368 = vmatprep.subr.bf16.mxu0 0
      %369 = vmatpush1.bf16.xpose.msra.mxu0 0
      %370 = vmatprep.subr.bf16.mxu0 0
      %371 = vmatpush1.bf16.xpose.msra.mxu0 0
      %372 = vmatprep.subr.bf16.mxu0 0
      %373 = vmatpush1.bf16.xpose.msra.mxu0 0
      %374 = vmatprep.subr.bf16.mxu0 0
      %375 = vmatpush1.bf16.xpose.msra.mxu0 0
      %376 = vmatprep.subr.bf16.mxu0 0
      %377 = vmatpush1.bf16.xpose.msra.mxu0 0
      %378 = vmatprep.subr.bf16.mxu0 0
      %379 = vmatpush1.bf16.xpose.msra.mxu0 0
      %380 = vmatprep.subr.bf16.mxu0 0
      %381 = vmatpush1.bf16.xpose.msra.mxu0 0
      %382 = vmatprep.subr.bf16.mxu0 0
      %383 = vmatpush1.bf16.xpose.msra.mxu0 %v366
      %384 = vmatprep.subr.bf16.mxu0 0
      %385 = vmatpush2.bf16.xpose.msra.mxu0 0
      %386 = vmatprep.subr.bf16.mxu0 0
      %387 = vmatpush2.bf16.xpose.msra.mxu0 0
      %388 = vmatprep.subr.bf16.mxu0 0
      %389 = vmatpush2.bf16.xpose.msra.mxu0 0
      %390 = vmatprep.subr.bf16.mxu0 0
      %391 = vmatpush2.bf16.xpose.msra.mxu0 0
      %392 = vmatprep.subr.bf16.mxu0 0
      %393 = vmatpush2.bf16.xpose.msra.mxu0 0
      %394 = vmatprep.subr.bf16.mxu0 0
      %395 = vmatpush2.bf16.xpose.msra.mxu0 0
      %396 = vmatprep.subr.bf16.mxu0 0
      %397 = vmatpush2.bf16.xpose.msra.mxu0 0
      %398 = vmatprep.subr.bf16.mxu0 0
      %399 = vmatpush2.bf16.xpose.msra.mxu0 0
      %400 = vmatprep.mubr.bf16.mxu0 0
      %401 = vmatmul.mubr.bf16.gmra.mxu0 %v363
      %v402 = vpop.f32.mrf.mxu0
      %v403 = vadd.f32 0.0, %v402
      %v404 = vpop.f32.mrf.mxu0
      %v405 = vpop.f32.mrf.mxu0
      %v406 = vpop.f32.mrf.mxu0
      %407 = vdwg.mxu0
      %v409 = vsel %vm315, %v305, 0
      %v412 = vsel %vm315, %v309, 0
      %414 = vmatprep.subr.bf16.mxu0 0
      %415 = vmatpush1.bf16.xpose.msra.mxu0 0
      %416 = vmatprep.subr.bf16.mxu0 0
      %417 = vmatpush1.bf16.xpose.msra.mxu0 0
      %418 = vmatprep.subr.bf16.mxu0 0
      %419 = vmatpush1.bf16.xpose.msra.mxu0 0
      %420 = vmatprep.subr.bf16.mxu0 0
      %421 = vmatpush1.bf16.xpose.msra.mxu0 0
      %422 = vmatprep.subr.bf16.mxu0 0
      %423 = vmatpush1.bf16.xpose.msra.mxu0 0
      %424 = vmatprep.subr.bf16.mxu0 0
      %425 = vmatpush1.bf16.xpose.msra.mxu0 0
      %426 = vmatprep.subr.bf16.mxu0 0
      %427 = vmatpush1.bf16.xpose.msra.mxu0 0
      %428 = vmatprep.subr.bf16.mxu0 0
      %429 = vmatpush1.bf16.xpose.msra.mxu0 %v412
      %430 = vmatprep.subr.bf16.mxu0 0
      %431 = vmatpush2.bf16.xpose.msra.mxu0 0
      %432 = vmatprep.subr.bf16.mxu0 0
      %433 = vmatpush2.bf16.xpose.msra.mxu0 0
      %434 = vmatprep.subr.bf16.mxu0 0
      %435 = vmatpush2.bf16.xpose.msra.mxu0 0
      %436 = vmatprep.subr.bf16.mxu0 0
      %437 = vmatpush2.bf16.xpose.msra.mxu0 0
      %438 = vmatprep.subr.bf16.mxu0 0
      %439 = vmatpush2.bf16.xpose.msra.mxu0 0
      %440 = vmatprep.subr.bf16.mxu0 0
      %441 = vmatpush2.bf16.xpose.msra.mxu0 0
      %442 = vmatprep.subr.bf16.mxu0 0
      %443 = vmatpush2.bf16.xpose.msra.mxu0 0
      %444 = vmatprep.subr.bf16.mxu0 0
      %445 = vmatpush2.bf16.xpose.msra.mxu0 0
      %446 = vmatprep.mubr.bf16.mxu0 0
      %447 = vmatmul.mubr.bf16.gmra.mxu0 %v409
      %v448 = vpop.f32.mrf.mxu0
      %v449 = vadd.f32 0.0, %v448
      %v450 = vpop.f32.mrf.mxu0
      %v451 = vpop.f32.mrf.mxu0
      %v452 = vpop.f32.mrf.mxu0
      %453 = vdwg.mxu0
      %v455 = vsel %vm315, %v306, 0
      %v458 = vsel %vm315, %v310, 0
      %460 = vmatprep.subr.bf16.mxu0 0
      %461 = vmatpush1.bf16.xpose.msra.mxu0 0
      %462 = vmatprep.subr.bf16.mxu0 0
      %463 = vmatpush1.bf16.xpose.msra.mxu0 0
      %464 = vmatprep.subr.bf16.mxu0 0
      %465 = vmatpush1.bf16.xpose.msra.mxu0 0
      %466 = vmatprep.subr.bf16.mxu0 0
      %467 = vmatpush1.bf16.xpose.msra.mxu0 0
      %468 = vmatprep.subr.bf16.mxu0 0
      %469 = vmatpush1.bf16.xpose.msra.mxu0 0
      %470 = vmatprep.subr.bf16.mxu0 0
      %471 = vmatpush1.bf16.xpose.msra.mxu0 0
      %472 = vmatprep.subr.bf16.mxu0 0
      %473 = vmatpush1.bf16.xpose.msra.mxu0 0
      %474 = vmatprep.subr.bf16.mxu0 0
      %475 = vmatpush1.bf16.xpose.msra.mxu0 %v458
      %476 = vmatprep.subr.bf16.mxu0 0
      %477 = vmatpush2.bf16.xpose.msra.mxu0 0
      %478 = vmatprep.subr.bf16.mxu0 0
      %479 = vmatpush2.bf16.xpose.msra.mxu0 0
      %480 = vmatprep.subr.bf16.mxu0 0
      %481 = vmatpush2.bf16.xpose.msra.mxu0 0
      %482 = vmatprep.subr.bf16.mxu0 0
      %483 = vmatpush2.bf16.xpose.msra.mxu0 0
      %484 = vmatprep.subr.bf16.mxu0 0
      %485 = vmatpush2.bf16.xpose.msra.mxu0 0
      %486 = vmatprep.subr.bf16.mxu0 0
      %487 = vmatpush2.bf16.xpose.msra.mxu0 0
      %488 = vmatprep.subr.bf16.mxu0 0
      %489 = vmatpush2.bf16.xpose.msra.mxu0 0
      %490 = vmatprep.subr.bf16.mxu0 0
      %491 = vmatpush2.bf16.xpose.msra.mxu0 0
      %492 = vmatprep.mubr.bf16.mxu0 0
      %493 = vmatmul.mubr.bf16.gmra.mxu0 %v455
      %v494 = vpop.f32.mrf.mxu0
      %v495 = vadd.f32 0.0, %v494
      %v496 = vpop.f32.mrf.mxu0
      %v497 = vpop.f32.mrf.mxu0
      %v498 = vpop.f32.mrf.mxu0
      %499 = vdwg.mxu0
      %v500 = vld [vmem:[#allocation2] sm:$0xff]
      %v501 = vld [vmem:[#allocation2 + $0x8] sm:$0xff]
      %v502 = vld [vmem:[#allocation2 + $0x10] sm:$0xff]
      %v503 = vld [vmem:[#allocation2 + $0x18] sm:$0xff]
      %v504 = vsel %vm315, %v357, -inf
      %505 = vmax.xlane.f32.xlu0 %v504
      %v506 = vpop.xlane.xlu0 %505
      %v507 = vsel %vm315, %v403, -inf
      %508 = vmax.xlane.f32.xlu0 %v507
      %v509 = vpop.xlane.xlu0 %508
      %v510 = vsel %vm315, %v449, -inf
      %511 = vmax.xlane.f32.xlu0 %v510
      %v512 = vpop.xlane.xlu0 %511
      %v513 = vsel %vm315, %v495, -inf
      %514 = vmax.xlane.f32.xlu0 %v513
      %v515 = vpop.xlane.xlu0 %514
      %v516 = vmax.f32 %v500, %v506
      %v517 = vmax.f32 %v501, %v509
      %v518 = vmax.f32 %v502, %v512
      %v519 = vmax.f32 %v503, %v515
      %v520 = vsub.f32 %v500, %v516
      %v521 = vsub.f32 %v501, %v517
      %v522 = vsub.f32 %v502, %v518
      %v523 = vsub.f32 %v503, %v519
      %v524 = vmul.f32 %v520, 1.442695
      %v525 = vpow.pop %v524
      %v526 = vmul.f32 %v521, 1.442695
      %v527 = vpow.pop %v526
      %v528 = vmul.f32 %v522, 1.442695
      %v529 = vpow.pop %v528
      %v530 = vmul.f32 %v523, 1.442695
      %v531 = vpow.pop %v530
      %533 = vset.pattern.permute.xlu0 0
      %534 = vperm.xlu0 %533, %v516
      %v535 = vpop.permute.xlu0 %534
      %538 = vset.pattern.permute.xlu0 0
      %539 = vperm.xlu0 %538, %v517
      %v540 = vpop.permute.xlu0 %539
      %543 = vset.pattern.permute.xlu0 0
      %544 = vperm.xlu0 %543, %v518
      %v545 = vpop.permute.xlu0 %544
      %548 = vset.pattern.permute.xlu0 0
      %549 = vperm.xlu0 %548, %v519
      %v550 = vpop.permute.xlu0 %549
      %v552 = vsub.f32 %v357, %v535
      %v553 = vsub.f32 %v403, %v540
      %v554 = vsub.f32 %v449, %v545
      %v555 = vsub.f32 %v495, %v550
      %v556 = vpack.c.bf16 %v552, %v552
      %v557 = vpack.c.bf16 %v553, %v553
      %v558 = vpack.c.bf16 %v554, %v554
      %v559 = vpack.c.bf16 %v555, %v555
      %v561 = vmul.bf16 %v556, 1069105081
      %v562 = vpow.bf16.pop %v561
      %v564 = vmul.bf16 %v557, 1069105081
      %v565 = vpow.bf16.pop %v564
      %v567 = vmul.bf16 %v558, 1069105081
      %v568 = vpow.bf16.pop %v567
      %v570 = vmul.bf16 %v559, 1069105081
      %v571 = vpow.bf16.pop %v570
      %v572 = vld [vmem:[#allocation3] sm:$0xff]
      %v573 = vld [vmem:[#allocation3 + $0x8] sm:$0xff]
      %v574 = vld [vmem:[#allocation3 + $0x10] sm:$0xff]
      %v575 = vld [vmem:[#allocation3 + $0x18] sm:$0xff]
      %v576 = vmul.f32 %v525, %v572
      %v577 = vmul.f32 %v527, %v573
      %v578 = vmul.f32 %v529, %v574
      %v579 = vmul.f32 %v531, %v575
      %v580 = vunpack.c.l.bf16 %v562
      %v581 = vunpack.c.l.bf16 %v565
      %v582 = vunpack.c.l.bf16 %v568
      %v583 = vunpack.c.l.bf16 %v571
      %v584 = vsel %vm315, %v580, 0.0
      %585 = vadd.xlane.f32.xlu0 %v584
      %v586 = vpop.xlane.xlu0 %585
      %v587 = vsel %vm315, %v581, 0.0
      %588 = vadd.xlane.f32.xlu0 %v587
      %v589 = vpop.xlane.xlu0 %588
      %v590 = vsel %vm315, %v582, 0.0
      %591 = vadd.xlane.f32.xlu0 %v590
      %v592 = vpop.xlane.xlu0 %591
      %v593 = vsel %vm315, %v583, 0.0
      %594 = vadd.xlane.f32.xlu0 %v593
      %v595 = vpop.xlane.xlu0 %594
      %v596 = vadd.f32 %v576, %v586
      %v597 = vadd.f32 %v577, %v589
      %v598 = vadd.f32 %v578, %v592
      %v599 = vadd.f32 %v579, %v595
      %vm600 = vcmask 7168
      %601 = vst.msk [vmem:[#allocation3] sm:$0xff] %vm600, %v596
      %602 = vst.msk [vmem:[#allocation3 + $0x8] sm:$0xff] %vm600, %v597
      %603 = vst.msk [vmem:[#allocation3 + $0x10] sm:$0xff] %vm600, %v598
      %604 = vst.msk [vmem:[#allocation3 + $0x18] sm:$0xff] %vm600, %v599
      %v605 = vld [vmem:[#allocation4] sm:$0xff]
      %v606 = vld [vmem:[#allocation4 + $0x8] sm:$0xff]
      %v607 = vld [vmem:[#allocation4 + $0x10] sm:$0xff]
      %v608 = vld [vmem:[#allocation4 + $0x18] sm:$0xff]
      %610 = vset.pattern.permute.xlu0 0
      %611 = vperm.xlu0 %610, %v525
      %v612 = vpop.permute.xlu0 %611
      %615 = vset.pattern.permute.xlu0 0
      %616 = vperm.xlu0 %615, %v527
      %v617 = vpop.permute.xlu0 %616
      %620 = vset.pattern.permute.xlu0 0
      %621 = vperm.xlu0 %620, %v529
      %v622 = vpop.permute.xlu0 %621
      %625 = vset.pattern.permute.xlu0 0
      %626 = vperm.xlu0 %625, %v531
      %v627 = vpop.permute.xlu0 %626
      %v629 = vmul.f32 %v612, %v605
      %v630 = vmul.f32 %v617, %v606
      %v631 = vmul.f32 %v622, %v607
      %v632 = vmul.f32 %v627, %v608
      %v634 = vsel %vm315, %v562, 0
      %vm636 = vcmask 1043456
      %v638 = vsel %vm636, %v311, 0
      %640 = vmatprep.subr.bf16.mxu0 0
      %641 = vmatpush1.bf16.msra.mxu0 0
      %642 = vmatprep.subr.bf16.mxu0 0
      %643 = vmatpush1.bf16.msra.mxu0 0
      %644 = vmatprep.subr.bf16.mxu0 0
      %645 = vmatpush1.bf16.msra.mxu0 0
      %646 = vmatprep.subr.bf16.mxu0 0
      %647 = vmatpush1.bf16.msra.mxu0 0
      %648 = vmatprep.subr.bf16.mxu0 0
      %649 = vmatpush1.bf16.msra.mxu0 0
      %650 = vmatprep.subr.bf16.mxu0 0
      %651 = vmatpush1.bf16.msra.mxu0 0
      %652 = vmatprep.subr.bf16.mxu0 0
      %653 = vmatpush1.bf16.msra.mxu0 0
      %654 = vmatprep.subr.bf16.mxu0 0
      %655 = vmatpush1.bf16.msra.mxu0 %v638
      %656 = vmatprep.subr.bf16.mxu0 0
      %657 = vmatpush2.bf16.msra.mxu0 0
      %658 = vmatprep.subr.bf16.mxu0 0
      %659 = vmatpush2.bf16.msra.mxu0 0
      %660 = vmatprep.subr.bf16.mxu0 0
      %661 = vmatpush2.bf16.msra.mxu0 0
      %662 = vmatprep.subr.bf16.mxu0 0
      %663 = vmatpush2.bf16.msra.mxu0 0
      %664 = vmatprep.subr.bf16.mxu0 0
      %665 = vmatpush2.bf16.msra.mxu0 0
      %666 = vmatprep.subr.bf16.mxu0 0
      %667 = vmatpush2.bf16.msra.mxu0 0
      %668 = vmatprep.subr.bf16.mxu0 0
      %669 = vmatpush2.bf16.msra.mxu0 0
      %670 = vmatprep.subr.bf16.mxu0 0
      %671 = vmatpush2.bf16.msra.mxu0 0
      %672 = vmatprep.mubr.bf16.mxu0 0
      %673 = vmatmul.mubr.bf16.gmra.mxu0 %v634
      %v674 = vpop.f32.mrf.mxu0
      %v675 = vadd.f32 0.0, %v674
      %v676 = vpop.f32.mrf.mxu0
      %v677 = vpop.f32.mrf.mxu0
      %v678 = vpop.f32.mrf.mxu0
      %679 = vdwg.mxu0
      %v681 = vsel %vm315, %v565, 0
      %v684 = vsel %vm636, %v312, 0
      %686 = vmatprep.subr.bf16.mxu0 0
      %687 = vmatpush1.bf16.msra.mxu0 0
      %688 = vmatprep.subr.bf16.mxu0 0
      %689 = vmatpush1.bf16.msra.mxu0 0
      %690 = vmatprep.subr.bf16.mxu0 0
      %691 = vmatpush1.bf16.msra.mxu0 0
      %692 = vmatprep.subr.bf16.mxu0 0
      %693 = vmatpush1.bf16.msra.mxu0 0
      %694 = vmatprep.subr.bf16.mxu0 0
      %695 = vmatpush1.bf16.msra.mxu0 0
      %696 = vmatprep.subr.bf16.mxu0 0
      %697 = vmatpush1.bf16.msra.mxu0 0
      %698 = vmatprep.subr.bf16.mxu0 0
      %699 = vmatpush1.bf16.msra.mxu0 0
      %700 = vmatprep.subr.bf16.mxu0 0
      %701 = vmatpush1.bf16.msra.mxu0 %v684
      %702 = vmatprep.subr.bf16.mxu0 0
      %703 = vmatpush2.bf16.msra.mxu0 0
      %704 = vmatprep.subr.bf16.mxu0 0
      %705 = vmatpush2.bf16.msra.mxu0 0
      %706 = vmatprep.subr.bf16.mxu0 0
      %707 = vmatpush2.bf16.msra.mxu0 0
      %708 = vmatprep.subr.bf16.mxu0 0
      %709 = vmatpush2.bf16.msra.mxu0 0
      %710 = vmatprep.subr.bf16.mxu0 0
      %711 = vmatpush2.bf16.msra.mxu0 0
      %712 = vmatprep.subr.bf16.mxu0 0
      %713 = vmatpush2.bf16.msra.mxu0 0
      %714 = vmatprep.subr.bf16.mxu0 0
      %715 = vmatpush2.bf16.msra.mxu0 0
      %716 = vmatprep.subr.bf16.mxu0 0
      %717 = vmatpush2.bf16.msra.mxu0 0
      %718 = vmatprep.mubr.bf16.mxu0 0
      %719 = vmatmul.mubr.bf16.gmra.mxu0 %v681
      %v720 = vpop.f32.mrf.mxu0
      %v721 = vadd.f32 0.0, %v720
      %v722 = vpop.f32.mrf.mxu0
      %v723 = vpop.f32.mrf.mxu0
      %v724 = vpop.f32.mrf.mxu0
      %725 = vdwg.mxu0
      %v727 = vsel %vm315, %v568, 0
      %v730 = vsel %vm636, %v313, 0
      %732 = vmatprep.subr.bf16.mxu0 0
      %733 = vmatpush1.bf16.msra.mxu0 0
      %734 = vmatprep.subr.bf16.mxu0 0
      %735 = vmatpush1.bf16.msra.mxu0 0
      %736 = vmatprep.subr.bf16.mxu0 0
      %737 = vmatpush1.bf16.msra.mxu0 0
      %738 = vmatprep.subr.bf16.mxu0 0
      %739 = vmatpush1.bf16.msra.mxu0 0
      %740 = vmatprep.subr.bf16.mxu0 0
      %741 = vmatpush1.bf16.msra.mxu0 0
      %742 = vmatprep.subr.bf16.mxu0 0
      %743 = vmatpush1.bf16.msra.mxu0 0
      %744 = vmatprep.subr.bf16.mxu0 0
      %745 = vmatpush1.bf16.msra.mxu0 0
      %746 = vmatprep.subr.bf16.mxu0 0
      %747 = vmatpush1.bf16.msra.mxu0 %v730
      %748 = vmatprep.subr.bf16.mxu0 0
      %749 = vmatpush2.bf16.msra.mxu0 0
      %750 = vmatprep.subr.bf16.mxu0 0
      %751 = vmatpush2.bf16.msra.mxu0 0
      %752 = vmatprep.subr.bf16.mxu0 0
      %753 = vmatpush2.bf16.msra.mxu0 0
      %754 = vmatprep.subr.bf16.mxu0 0
      %755 = vmatpush2.bf16.msra.mxu0 0
      %756 = vmatprep.subr.bf16.mxu0 0
      %757 = vmatpush2.bf16.msra.mxu0 0
      %758 = vmatprep.subr.bf16.mxu0 0
      %759 = vmatpush2.bf16.msra.mxu0 0
      %760 = vmatprep.subr.bf16.mxu0 0
      %761 = vmatpush2.bf16.msra.mxu0 0
      %762 = vmatprep.subr.bf16.mxu0 0
      %763 = vmatpush2.bf16.msra.mxu0 0
      %764 = vmatprep.mubr.bf16.mxu0 0
      %765 = vmatmul.mubr.bf16.gmra.mxu0 %v727
      %v766 = vpop.f32.mrf.mxu0
      %v767 = vadd.f32 0.0, %v766
      %v768 = vpop.f32.mrf.mxu0
      %v769 = vpop.f32.mrf.mxu0
      %v770 = vpop.f32.mrf.mxu0
      %771 = vdwg.mxu0
      %v773 = vsel %vm315, %v571, 0
      %v776 = vsel %vm636, %v314, 0
      %778 = vmatprep.subr.bf16.mxu0 0
      %779 = vmatpush1.bf16.msra.mxu0 0
      %780 = vmatprep.subr.bf16.mxu0 0
      %781 = vmatpush1.bf16.msra.mxu0 0
      %782 = vmatprep.subr.bf16.mxu0 0
      %783 = vmatpush1.bf16.msra.mxu0 0
      %784 = vmatprep.subr.bf16.mxu0 0
      %785 = vmatpush1.bf16.msra.mxu0 0
      %786 = vmatprep.subr.bf16.mxu0 0
      %787 = vmatpush1.bf16.msra.mxu0 0
      %788 = vmatprep.subr.bf16.mxu0 0
      %789 = vmatpush1.bf16.msra.mxu0 0
      %790 = vmatprep.subr.bf16.mxu0 0
      %791 = vmatpush1.bf16.msra.mxu0 0
      %792 = vmatprep.subr.bf16.mxu0 0
      %793 = vmatpush1.bf16.msra.mxu0 %v776
      %794 = vmatprep.subr.bf16.mxu0 0
      %795 = vmatpush2.bf16.msra.mxu0 0
      %796 = vmatprep.subr.bf16.mxu0 0
      %797 = vmatpush2.bf16.msra.mxu0 0
      %798 = vmatprep.subr.bf16.mxu0 0
      %799 = vmatpush2.bf16.msra.mxu0 0
      %800 = vmatprep.subr.bf16.mxu0 0
      %801 = vmatpush2.bf16.msra.mxu0 0
      %802 = vmatprep.subr.bf16.mxu0 0
      %803 = vmatpush2.bf16.msra.mxu0 0
      %804 = vmatprep.subr.bf16.mxu0 0
      %805 = vmatpush2.bf16.msra.mxu0 0
      %806 = vmatprep.subr.bf16.mxu0 0
      %807 = vmatpush2.bf16.msra.mxu0 0
      %808 = vmatprep.subr.bf16.mxu0 0
      %809 = vmatpush2.bf16.msra.mxu0 0
      %810 = vmatprep.mubr.bf16.mxu0 0
      %811 = vmatmul.mubr.bf16.gmra.mxu0 %v773
      %v812 = vpop.f32.mrf.mxu0
      %v813 = vadd.f32 0.0, %v812
      %v814 = vpop.f32.mrf.mxu0
      %v815 = vpop.f32.mrf.mxu0
      %v816 = vpop.f32.mrf.mxu0
      %817 = vdwg.mxu0
      %v818 = vadd.f32 %v629, %v675
      %v819 = vadd.f32 %v630, %v721
      %v820 = vadd.f32 %v631, %v767
      %v821 = vadd.f32 %v632, %v813
      %822 = vst.msk [vmem:[#allocation4] sm:$0xff] %vm315, %v818
      %823 = vst.msk [vmem:[#allocation4 + $0x8] sm:$0xff] %vm315, %v819
      %824 = vst.msk [vmem:[#allocation4 + $0x10] sm:$0xff] %vm315, %v820
      %825 = vst.msk [vmem:[#allocation4 + $0x18] sm:$0xff] %vm315, %v821
      %826 = vst.msk [vmem:[#allocation2] sm:$0xff] %vm600, %v516
      %827 = vst.msk [vmem:[#allocation2 + $0x8] sm:$0xff] %vm600, %v517
      %828 = vst.msk [vmem:[#allocation2 + $0x10] sm:$0xff] %vm600, %v518
      %829 = vst.msk [vmem:[#allocation2 + $0x18] sm:$0xff] %vm600, %v519
      // Predicated region
      $region37: #{_flash_mha_impl.4} parent=31 // pred_check
        %p830 = pneg %p285
      $region38: #{_flash_mha_impl.4} parent=31 // pred_check_branch
        %832 = sbr.rel (%p830) target = $region40
      $region39: #{_flash_mha_impl.4} parent=31 // pred_region
        %v833 = vld [vmem:[#allocation3] sm:$0xff]
        %v834 = vld [vmem:[#allocation3 + $0x8] sm:$0xff]
        %v835 = vld [vmem:[#allocation3 + $0x10] sm:$0xff]
        %v836 = vld [vmem:[#allocation3 + $0x18] sm:$0xff]
        %v837 = vrcp.pop %v833
        %v838 = vrcp.pop %v834
        %v839 = vrcp.pop %v835
        %v840 = vrcp.pop %v836
        %v841 = vld [vmem:[#allocation4] sm:$0xff]
        %v842 = vld [vmem:[#allocation4 + $0x8] sm:$0xff]
        %v843 = vld [vmem:[#allocation4 + $0x10] sm:$0xff]
        %v844 = vld [vmem:[#allocation4 + $0x18] sm:$0xff]
        %846 = vset.pattern.permute.xlu0 0
        %847 = vperm.xlu0 %846, %v837
        %v848 = vpop.permute.xlu0 %847
        %851 = vset.pattern.permute.xlu0 0
        %852 = vperm.xlu0 %851, %v838
        %v853 = vpop.permute.xlu0 %852
        %856 = vset.pattern.permute.xlu0 0
        %857 = vperm.xlu0 %856, %v839
        %v858 = vpop.permute.xlu0 %857
        %861 = vset.pattern.permute.xlu0 0
        %862 = vperm.xlu0 %861, %v840
        %v863 = vpop.permute.xlu0 %862
        %v865 = vmul.f32 %v841, %v848
        %v866 = vmul.f32 %v842, %v853
        %v867 = vmul.f32 %v843, %v858
        %v868 = vmul.f32 %v844, %v863
        %v869 = vpack.c.bf16 %v865, %v865
        %v870 = vpack.c.bf16 %v866, %v866
        %v871 = vpack.c.bf16 %v867, %v867
        %v872 = vpack.c.bf16 %v868, %v868
        %vm873 = vcmask 60416
        %874 = vst.msk [vmem:[%s282] sm:$0xf] %vm873, %v869
        %875 = vst.msk [vmem:[%s282 + $0x4] sm:$0xf] %vm873, %v870
        %876 = vst.msk [vmem:[%s282 + $0x8] sm:$0xf] %vm873, %v871
        %877 = vst.msk [vmem:[%s282 + $0xc] sm:$0xf] %vm873, %v872
      $region40: #{_flash_mha_impl.4} parent=31 // pred_fallthru
        _
      %s878 = smul.u32 4, %s19
      %p879 = scmp.lt.s32.totalorder %s878, 7
      %s880 = scalar_select %p879, %s878, 7
      %p881 = scmp.lt.s32.totalorder %s20, 0
      %s882 = scalar_select %p881, %s20, 0
      %s883 = sadd.s32 %s882, %s880
      %s884 = smul.addr %s883, 4
      %s885 = scalar_lea.vmem %s3, %s884
      // Predicated region
      $region41: #{_flash_mha_impl.4} parent=31 // pred_check
        %p886 = pneg %p137
      $region42: #{_flash_mha_impl.4} parent=31 // pred_check_branch
        %888 = sbr.rel (%p886) target = $region44
      $region43: #{_flash_mha_impl.4} parent=31 // pred_region
        %s889 = smul.u32 4, %s19
      $region44: #{_flash_mha_impl.4} parent=31 // pred_fallthru
        _
    $region32: #{_flash_mha_impl.4} parent=5 // pred_fallthru
      _
    %p890 = scmp.le.s32.totalorder 2, %s9
    // Predicated region
    $region45: #{_flash_mha_impl.4} parent=5 // pred_check
      %p891 = pneg %p890
    $region46: #{_flash_mha_impl.4} parent=5 // pred_check_branch
      %893 = sbr.rel (%p891) target = $region48
    $region47: #{_flash_mha_impl.4} parent=5 // pred_region
      %s894 = ssub.s32 %s9, 2
      // Predicated region
      $region49: #{_flash_mha_impl.4} parent=47 // pred_check
        %p895 = pneg %p143
      $region50: #{_flash_mha_impl.4} parent=47 // pred_check_branch
        %897 = sbr.rel (%p895) target = $region52
      $region51: #{_flash_mha_impl.4} parent=47 // pred_region
        %s898 = smul.u32 4, %s22
        %p899 = scmp.lt.s32.totalorder %s898, 7
        %s900 = scalar_select %p899, %s898, 7
        %p901 = scmp.lt.s32.totalorder %s23, 0
        %s902 = scalar_select %p901, %s23, 0
        %s903 = sadd.s32 %s902, %s900
        %s904 = smul.addr %s903, 4
        %s905 = scalar_lea.vmem %s3, %s904
      $region52: #{_flash_mha_impl.4} parent=47 // pred_fallthru
        _
    $region48: #{_flash_mha_impl.4} parent=5 // pred_fallthru
      _
  $region6: #{_flash_mha_impl.4} parent=0 // loop_footer
    %s13 = sadd.s32 1, %s9
  $region7: #{_flash_mha_impl.4} parent=0 // loop_footer_branch
    %8 = sbr.rel target = $region3
  $region8: #{_flash_mha_impl.4} parent=0 // loop_exit
    _

</llo_original>
